<compile_context>
chip_gen: v6e
topology: v6e:2x2x1
jax: 0.10.0
libtpu: 0.0.40
codegen_flags: <defaults>
</compile_context>

<pallas_src>
import functools

import jax
import jax.numpy as jnp
import numpy as np
from jax.experimental import pallas as pl
from jax.experimental.pallas import tpu as pltpu


# ----------------------------------------------------------------------------- kernel
def _fused_kernel(x_ref, w2_ref, bias2_ref, masks_ref, wlt_ref, blin_ref,
                  o_ref, xpad_ref, flat_ref, *, H, W, KH, KW, SUB, PADL):
    """Fused Normalizer + Conv3x3(pad=1) + ReLU + Linear for one batch sample.

    x_ref     : (1, Cin, H*W)         raw sample (channels on sublanes, pixels on lanes)
    w2_ref    : (Cout, KH*KW*SUB)     conv weights with 1/std folded in, tap-major,
                                      channel rows zero-padded to SUB per tap
    bias2_ref : (Cout, H*W)           conv bias + border-aware (-w/std * mean) correction
    masks_ref : (KH*KW, H*W)          per-tap validity mask (zero padding of the
                                      normalized tensor, PyTorch semantics)
    wlt_ref   : (Cout*H*W, C)         classifier weight, pre-transposed
    blin_ref  : (1, C)                classifier bias
    o_ref     : (1, 1, C)             logits for this sample
    xpad_ref  : (SUB, H*W + 2*PADL)   VMEM scratch: lane/channel padded flattened input
    flat_ref  : (1, Cout*H*W)         VMEM scratch: flattened features (NCHW order)
    """
    HW = H * W
    Cin = x_ref.shape[1]
    Cout = bias2_ref.shape[0]

    # Stage the sample into a zero-padded scratch (aligned stores only: PADL % 128 == 0).
    xpad_ref[...] = jnp.zeros_like(xpad_ref)
    xpad_ref[pl.ds(0, Cin), pl.ds(PADL, HW)] = x_ref[0]

    # im2col: each 3x3 tap is a lane-shifted view of the flattened image, masked where the
    # source pixel falls outside the image (== zero padding of the normalized tensor).
    taps = []
    for dy in range(KH):
        for dx in range(KW):
            k = dy * KW + dx
            start = PADL + (dy - 1) * W + (dx - 1)
            shifted = xpad_ref[:, pl.ds(start, HW)]          # (SUB, HW), lane-dense
            taps.append(shifted * masks_ref[k:k + 1, :])
    patches = jnp.concatenate(taps, axis=0)                  # (KH*KW*SUB, HW)

    # Conv (+ folded normalization) as a single MXU matmul, then bias + ReLU.
    feat = jnp.dot(w2_ref[...], patches, preferred_element_type=jnp.float32)
    feat = jnp.maximum(feat + bias2_ref[...], 0.0)           # (Cout, HW) lane-dense

    # Flatten to PyTorch's NCHW order (co*H*W + y*W + x) via aligned lane-offset stores.
    for co in range(Cout):
        flat_ref[:, pl.ds(co * HW, HW)] = feat[co:co + 1, :]

    logits = jnp.dot(flat_ref[...], wlt_ref[...], preferred_element_type=jnp.float32)
    o_ref[0] = (logits + blin_ref[...]).astype(o_ref.dtype)


# ----------------------------------------------------------------------------- init-time prep
def prepare_params(params, H, W):
    """One-time preprocessing of the PyTorch-style parameters (hoisted out of forward)."""
    mean = params["mean"].astype(jnp.float32)              # (Cin,)
    std = params["std"].astype(jnp.float32)                # (Cin,)
    w_conv = params["w_conv"].astype(jnp.float32)          # (Cout, Cin, KH, KW)
    b_conv = params["b_conv"].astype(jnp.float32)          # (Cout,)
    w_lin = params["w_lin"].astype(jnp.float32)            # (C, Cout*H*W)
    b_lin = params["b_lin"].astype(jnp.float32)            # (C,)

    Cout, Cin, KH, KW = w_conv.shape
    num_classes = w_lin.shape[0]
    HW = H * W
    SUB = ((Cin + 7) // 8) * 8        # channel rows per tap, padded to the sublane tile

    # Fold 1/std into the conv weights.
    wp = w_conv / std[None, :, None, None]                  # (Cout, Cin, KH, KW)

    # Tap-major, channel-padded weight matrix: column index = (dy*KW + dx)*SUB + ci.
    w_kc = jnp.transpose(wp, (0, 2, 3, 1))                  # (Cout, KH, KW, Cin)
    w_kc = jnp.pad(w_kc, ((0, 0), (0, 0), (0, 0), (0, SUB - Cin)))
    w2 = w_kc.reshape(Cout, KH * KW * SUB)

    # Per-tap validity masks over output pixels (PyTorch zero-pads the normalized tensor).
    ys, xs = jnp.arange(H), jnp.arange(W)
    masks = []
    for dy in range(KH):
        for dx in range(KW):
            vy = (ys + dy - 1 >= 0) & (ys + dy - 1 < H)
            vx = (xs + dx - 1 >= 0) & (xs + dx - 1 < W)
            masks.append((vy[:, None] & vx[None, :]).reshape(HW))
    masks = jnp.stack(masks, axis=0).astype(jnp.float32)    # (KH*KW, HW)

    # Mean folded into a per-pixel bias: only in-bounds taps contribute -(w/std)*mean.
    tap_mean = jnp.einsum("ocij,c->oij", wp, mean).reshape(Cout, KH * KW)
    bias2 = b_conv[:, None] - tap_mean @ masks              # (Cout, HW)

    return {
        "w2": w2,                                           # (Cout, KH*KW*SUB)
        "bias2": bias2,                                     # (Cout, HW)
        "masks": masks,                                     # (KH*KW, HW)
        "wlt": w_lin.T,                                     # (Cout*HW, C)
        "blin": b_lin.reshape(1, num_classes),              # (1, C)
    }


# ----------------------------------------------------------------------------- forward
def transform_net_forward(x_nchw, prepared):
    """TransformNet.forward: Normalizer -> Conv3x3+ReLU -> Flatten -> Linear -> Flatten."""
    N, Cin, H, W = x_nchw.shape
    HW = H * W
    w2, bias2, masks = prepared["w2"], prepared["bias2"], prepared["masks"]
    wlt, blin = prepared["wlt"], prepared["blin"]
    Cout = bias2.shape[0]
    K = masks.shape[0]
    KH = KW = int(round(K ** 0.5))
    SUB = w2.shape[1] // K
    num_classes = blin.shape[1]

    # Lane-dense view of the NCHW input (free reshape, no transpose, no jnp.pad).
    x2 = x_nchw.reshape(N, Cin, HW).astype(jnp.float32)

    # Left/right pad of the flattened spatial axis, rounded to 128 so all stores are aligned.
    PADL = max(128, -(-(W + 1) // 128) * 128)

    kernel = functools.partial(_fused_kernel, H=H, W=W, KH=KH, KW=KW, SUB=SUB, PADL=PADL)

    out = pl.pallas_call(
        kernel,
        out_shape=jax.ShapeDtypeStruct((N, 1, num_classes), jnp.float32),
        grid_spec=pltpu.PrefetchScalarGridSpec(
            num_scalar_prefetch=0,
            grid=(N,),
            in_specs=[
                pl.BlockSpec((1, Cin, HW), lambda n: (n, 0, 0)),
                pl.BlockSpec((Cout, K * SUB), lambda n: (0, 0)),
                pl.BlockSpec((Cout, HW), lambda n: (0, 0)),
                pl.BlockSpec((K, HW), lambda n: (0, 0)),
                pl.BlockSpec((Cout * HW, num_classes), lambda n: (0, 0)),
                pl.BlockSpec((1, num_classes), lambda n: (0, 0)),
            ],
            out_specs=pl.BlockSpec((1, 1, num_classes), lambda n: (n, 0, 0)),
            scratch_shapes=[
                pltpu.VMEM((SUB, HW + 2 * PADL), jnp.float32),   # padded input slab
                pltpu.VMEM((1, Cout * HW), jnp.float32),         # flattened features
            ],
        ),
        compiler_params=pltpu.CompilerParams(
            dimension_semantics=("parallel",),
        ),
    )(x2, w2, bias2, masks, wlt, blin)

    # classifier's trailing Flatten(1) is the identity on 2-D logits.
    return out.reshape(N, num_classes)


# ----------------------------------------------------------------------------- reference
def reference_forward(x_nchw, params):
    """Pure-JAX reference with the unfused math (for correctness checking)."""
    x = jnp.transpose(x_nchw, (0, 2, 3, 1)).astype(jnp.float32)       # NHWC
    N, H, W, Cin = x.shape
    Cout = params["w_conv"].shape[0]
    xn = (x - params["mean"].reshape(1, 1, 1, Cin)) / params["std"].reshape(1, 1, 1, Cin)
    xp = jnp.pad(xn, ((0, 0), (1, 1), (1, 1), (0, 0)))
    w_k = jnp.transpose(params["w_conv"], (2, 3, 1, 0)).reshape(9, Cin, Cout)
    acc = jnp.zeros((N, H, W, Cout), jnp.float32)
    for k in range(9):
        dy, dx = divmod(k, 3)
        acc = acc + jnp.einsum("nhwi,io->nhwo", xp[:, dy:dy + H, dx:dx + W, :], w_k[k])
    feat = jnp.maximum(acc + params["b_conv"].reshape(1, 1, 1, Cout), 0.0)
    flat = jnp.transpose(feat, (0, 3, 1, 2)).reshape(N, -1)           # NCHW flatten order
    return flat @ params["w_lin"].T + params["b_lin"]


# ----------------------------------------------------------------------------- main
if __name__ == "__main__":
    key = jax.random.PRNGKey(0)
    k_x, k_w, k_b, k_wl, k_bl = jax.random.split(key, 5)

    N, Cin, H, W = 2, 4, 16, 16
    Cout, num_classes = 8, 10

    x = jax.random.normal(k_x, (N, Cin, H, W), dtype=jnp.float32)

    params = {
        # Deterministic "Normalizer" stats (synthetic dataset_name).
        "mean": jnp.array([0.4914, 0.4822, 0.4465, 0.5000], dtype=jnp.float32),
        "std": jnp.array([0.2470, 0.2435, 0.2616, 0.2500], dtype=jnp.float32),
        "w_conv": 0.1 * jax.random.normal(k_w, (Cout, Cin, 3, 3), dtype=jnp.float32),
        "b_conv": 0.05 * jax.random.normal(k_b, (Cout,), dtype=jnp.float32),
        "w_lin": 0.02 * jax.random.normal(k_wl, (num_classes, Cout * H * W), dtype=jnp.float32),
        "b_lin": 0.01 * jax.random.normal(k_bl, (num_classes,), dtype=jnp.float32),
    }

    prepared = prepare_params(params, H, W)        # hoisted one-time preprocessing

    fwd = jax.jit(transform_net_forward)
    out = jax.block_until_ready(fwd(x, prepared))

    ref = jax.block_until_ready(reference_forward(x, params))
    assert out.shape == (N, num_classes)
    np.testing.assert_allclose(np.asarray(out), np.asarray(ref), rtol=2e-3, atol=2e-3)

    print("KERNEL_OK")
</pallas_src>

<mosaic_0001>
module attributes {stable_mosaic.version = 11 : i64} {
  func.func @_fused_kernel(%arg0: i32, %arg1: memref<1x4x256xf32, #tpu.memory_space<vmem>>, %arg2: memref<8x72xf32, #tpu.memory_space<vmem>>, %arg3: memref<8x256xf32, #tpu.memory_space<vmem>>, %arg4: memref<9x256xf32, #tpu.memory_space<vmem>>, %arg5: memref<2048x10xf32, #tpu.memory_space<vmem>>, %arg6: memref<1x10xf32, #tpu.memory_space<vmem>>, %arg7: memref<1x1x10xf32, #tpu.memory_space<vmem>>, %arg8: memref<8x512xf32, #tpu.memory_space<vmem>>, %arg9: memref<1x2048xf32, #tpu.memory_space<vmem>>) attributes {dimension_semantics = [#tpu.dimension_semantics<parallel>], iteration_bounds = array<i64: 2>, scalar_prefetch = 0 : i64, scratch_operands = 2 : i64, tpu.core_type = #tpu.core_type<tc>, window_params = [{transform_indices = @transform_0, window_bounds = array<i64: 1, 4, 256>}, {pipeline_mode = #tpu.pipeline_mode<synchronous>, transform_indices = @transform_1, window_bounds = array<i64: 8, 72>}, {pipeline_mode = #tpu.pipeline_mode<synchronous>, transform_indices = @transform_2, window_bounds = array<i64: 8, 256>}, {pipeline_mode = #tpu.pipeline_mode<synchronous>, transform_indices = @transform_3, window_bounds = array<i64: 9, 256>}, {pipeline_mode = #tpu.pipeline_mode<synchronous>, transform_indices = @transform_4, window_bounds = array<i64: 2048, 10>}, {pipeline_mode = #tpu.pipeline_mode<synchronous>, transform_indices = @transform_5, window_bounds = array<i64: 1, 10>}, {transform_indices = @transform_6, window_bounds = array<i64: 1, 1, 10>}]} {
    %cst = arith.constant 0.000000e+00 : f32
    %0 = vector.broadcast %cst : f32 to vector<8x512xf32>
    %c0 = arith.constant 0 : index
    %c0_0 = arith.constant 0 : index
    %1 = vector.load %arg8[%c0, %c0_0] : memref<8x512xf32, #tpu.memory_space<vmem>>, vector<8x512xf32>
    tpu.vector_store %arg8[%c0, %c0_0], %0 {strides = array<i32>} : memref<8x512xf32, #tpu.memory_space<vmem>>, vector<8x512xf32>,
    %c0_1 = arith.constant 0 : index
    %c0_2 = arith.constant 0 : index
    %c0_3 = arith.constant 0 : index
    %2 = vector.load %arg1[%c0_1, %c0_2, %c0_3] : memref<1x4x256xf32, #tpu.memory_space<vmem>>, vector<1x4x256xf32>
    %3 = vector.shape_cast %2 : vector<1x4x256xf32> to vector<4x256xf32>
    %c0_4 = arith.constant 0 : index
    %c128 = arith.constant 128 : index
    %4 = vector.load %arg8[%c0_4, %c128] : memref<8x512xf32, #tpu.memory_space<vmem>>, vector<4x256xf32>
    tpu.vector_store %arg8[%c0_4, %c128], %3 {strides = array<i32>} : memref<8x512xf32, #tpu.memory_space<vmem>>, vector<4x256xf32>,
    %c0_5 = arith.constant 0 : index
    %c111 = arith.constant 111 : index
    %5 = vector.load %arg8[%c0_5, %c111] : memref<8x512xf32, #tpu.memory_space<vmem>>, vector<8x256xf32>
    %c0_6 = arith.constant 0 : index
    %c0_7 = arith.constant 0 : index
    %6 = vector.load %arg4[%c0_6, %c0_7] : memref<9x256xf32, #tpu.memory_space<vmem>>, vector<1x256xf32>
    %7 = vector.broadcast %6 : vector<1x256xf32> to vector<8x256xf32>
    %8 = arith.mulf %5, %7 : vector<8x256xf32>
    %c0_8 = arith.constant 0 : index
    %c112 = arith.constant 112 : index
    %9 = vector.load %arg8[%c0_8, %c112] : memref<8x512xf32, #tpu.memory_space<vmem>>, vector<8x256xf32>
    %c1 = arith.constant 1 : index
    %c0_9 = arith.constant 0 : index
    %10 = vector.load %arg4[%c1, %c0_9] : memref<9x256xf32, #tpu.memory_space<vmem>>, vector<1x256xf32>
    %11 = vector.broadcast %10 : vector<1x256xf32> to vector<8x256xf32>
    %12 = arith.mulf %9, %11 : vector<8x256xf32>
    %c0_10 = arith.constant 0 : index
    %c113 = arith.constant 113 : index
    %13 = vector.load %arg8[%c0_10, %c113] : memref<8x512xf32, #tpu.memory_space<vmem>>, vector<8x256xf32>
    %c2 = arith.constant 2 : index
    %c0_11 = arith.constant 0 : index
    %14 = vector.load %arg4[%c2, %c0_11] : memref<9x256xf32, #tpu.memory_space<vmem>>, vector<1x256xf32>
    %15 = vector.broadcast %14 : vector<1x256xf32> to vector<8x256xf32>
    %16 = arith.mulf %13, %15 : vector<8x256xf32>
    %c0_12 = arith.constant 0 : index
    %c127 = arith.constant 127 : index
    %17 = vector.load %arg8[%c0_12, %c127] : memref<8x512xf32, #tpu.memory_space<vmem>>, vector<8x256xf32>
    %c3 = arith.constant 3 : index
    %c0_13 = arith.constant 0 : index
    %18 = vector.load %arg4[%c3, %c0_13] : memref<9x256xf32, #tpu.memory_space<vmem>>, vector<1x256xf32>
    %19 = vector.broadcast %18 : vector<1x256xf32> to vector<8x256xf32>
    %20 = arith.mulf %17, %19 : vector<8x256xf32>
    %c0_14 = arith.constant 0 : index
    %c128_15 = arith.constant 128 : index
    %21 = vector.load %arg8[%c0_14, %c128_15] : memref<8x512xf32, #tpu.memory_space<vmem>>, vector<8x256xf32>
    %c4 = arith.constant 4 : index
    %c0_16 = arith.constant 0 : index
    %22 = vector.load %arg4[%c4, %c0_16] : memref<9x256xf32, #tpu.memory_space<vmem>>, vector<1x256xf32>
    %23 = vector.broadcast %22 : vector<1x256xf32> to vector<8x256xf32>
    %24 = arith.mulf %21, %23 : vector<8x256xf32>
    %c0_17 = arith.constant 0 : index
    %c129 = arith.constant 129 : index
    %25 = vector.load %arg8[%c0_17, %c129] : memref<8x512xf32, #tpu.memory_space<vmem>>, vector<8x256xf32>
    %c5 = arith.constant 5 : index
    %c0_18 = arith.constant 0 : index
    %26 = vector.load %arg4[%c5, %c0_18] : memref<9x256xf32, #tpu.memory_space<vmem>>, vector<1x256xf32>
    %27 = vector.broadcast %26 : vector<1x256xf32> to vector<8x256xf32>
    %28 = arith.mulf %25, %27 : vector<8x256xf32>
    %c0_19 = arith.constant 0 : index
    %c143 = arith.constant 143 : index
    %29 = vector.load %arg8[%c0_19, %c143] : memref<8x512xf32, #tpu.memory_space<vmem>>, vector<8x256xf32>
    %c6 = arith.constant 6 : index
    %c0_20 = arith.constant 0 : index
    %30 = vector.load %arg4[%c6, %c0_20] : memref<9x256xf32, #tpu.memory_space<vmem>>, vector<1x256xf32>
    %31 = vector.broadcast %30 : vector<1x256xf32> to vector<8x256xf32>
    %32 = arith.mulf %29, %31 : vector<8x256xf32>
    %c0_21 = arith.constant 0 : index
    %c144 = arith.constant 144 : index
    %33 = vector.load %arg8[%c0_21, %c144] : memref<8x512xf32, #tpu.memory_space<vmem>>, vector<8x256xf32>
    %c7 = arith.constant 7 : index
    %c0_22 = arith.constant 0 : index
    %34 = vector.load %arg4[%c7, %c0_22] : memref<9x256xf32, #tpu.memory_space<vmem>>, vector<1x256xf32>
    %35 = vector.broadcast %34 : vector<1x256xf32> to vector<8x256xf32>
    %36 = arith.mulf %33, %35 : vector<8x256xf32>
    %c0_23 = arith.constant 0 : index
    %c145 = arith.constant 145 : index
    %37 = vector.load %arg8[%c0_23, %c145] : memref<8x512xf32, #tpu.memory_space<vmem>>, vector<8x256xf32>
    %c8 = arith.constant 8 : index
    %c0_24 = arith.constant 0 : index
    %38 = vector.load %arg4[%c8, %c0_24] : memref<9x256xf32, #tpu.memory_space<vmem>>, vector<1x256xf32>
    %39 = vector.broadcast %38 : vector<1x256xf32> to vector<8x256xf32>
    %40 = arith.mulf %37, %39 : vector<8x256xf32>
    %41 = tpu.concatenate %8, %12, %16, %20, %24, %28, %32, %36, %40 in 0 : vector<8x256xf32>, vector<8x256xf32>, vector<8x256xf32>, vector<8x256xf32>, vector<8x256xf32>, vector<8x256xf32>, vector<8x256xf32>, vector<8x256xf32>, vector<8x256xf32> -> vector<72x256xf32>
    %c0_25 = arith.constant 0 : index
    %c0_26 = arith.constant 0 : index
    %42 = vector.load %arg2[%c0_25, %c0_26] : memref<8x72xf32, #tpu.memory_space<vmem>>, vector<8x72xf32>
    %cst_27 = arith.constant dense<0.000000e+00> : vector<8x256xf32>
    %43 = tpu.matmul %42, %41, %cst_27 {dimension_numbers = #tpu.dot_dimension_numbers<[1], [0], [0], [1], [0, 0, 1, 1], [], []>} : vector<8x72xf32>, vector<72x256xf32>, vector<8x256xf32> -> vector<8x256xf32>
    %c0_28 = arith.constant 0 : index
    %c0_29 = arith.constant 0 : index
    %44 = vector.load %arg3[%c0_28, %c0_29] : memref<8x256xf32, #tpu.memory_space<vmem>>, vector<8x256xf32>
    %45 = arith.addf %43, %44 : vector<8x256xf32>
    %cst_30 = arith.constant 0.000000e+00 : f32
    %46 = vector.broadcast %cst_30 : f32 to vector<8x256xf32>
    %47 = arith.maximumf %45, %46 : vector<8x256xf32>
    %48 = vector.extract_strided_slice %47 {offsets = [0, 0], sizes = [1, 256], strides = [1, 1]} : vector<8x256xf32> to vector<1x256xf32>
    %c0_31 = arith.constant 0 : index
    %c0_32 = arith.constant 0 : index
    %49 = vector.load %arg9[%c0_31, %c0_32] : memref<1x2048xf32, #tpu.memory_space<vmem>>, vector<1x256xf32>
    tpu.vector_store %arg9[%c0_31, %c0_32], %48 {strides = array<i32>} : memref<1x2048xf32, #tpu.memory_space<vmem>>, vector<1x256xf32>,
    %50 = vector.extract_strided_slice %47 {offsets = [1, 0], sizes = [1, 256], strides = [1, 1]} : vector<8x256xf32> to vector<1x256xf32>
    %c0_33 = arith.constant 0 : index
    %c256 = arith.constant 256 : index
    %51 = vector.load %arg9[%c0_33, %c256] : memref<1x2048xf32, #tpu.memory_space<vmem>>, vector<1x256xf32>
    tpu.vector_store %arg9[%c0_33, %c256], %50 {strides = array<i32>} : memref<1x2048xf32, #tpu.memory_space<vmem>>, vector<1x256xf32>,
    %52 = vector.extract_strided_slice %47 {offsets = [2, 0], sizes = [1, 256], strides = [1, 1]} : vector<8x256xf32> to vector<1x256xf32>
    %c0_34 = arith.constant 0 : index
    %c512 = arith.constant 512 : index
    %53 = vector.load %arg9[%c0_34, %c512] : memref<1x2048xf32, #tpu.memory_space<vmem>>, vector<1x256xf32>
    tpu.vector_store %arg9[%c0_34, %c512], %52 {strides = array<i32>} : memref<1x2048xf32, #tpu.memory_space<vmem>>, vector<1x256xf32>,
    %54 = vector.extract_strided_slice %47 {offsets = [3, 0], sizes = [1, 256], strides = [1, 1]} : vector<8x256xf32> to vector<1x256xf32>
    %c0_35 = arith.constant 0 : index
    %c768 = arith.constant 768 : index
    %55 = vector.load %arg9[%c0_35, %c768] : memref<1x2048xf32, #tpu.memory_space<vmem>>, vector<1x256xf32>
    tpu.vector_store %arg9[%c0_35, %c768], %54 {strides = array<i32>} : memref<1x2048xf32, #tpu.memory_space<vmem>>, vector<1x256xf32>,
    %56 = vector.extract_strided_slice %47 {offsets = [4, 0], sizes = [1, 256], strides = [1, 1]} : vector<8x256xf32> to vector<1x256xf32>
    %c0_36 = arith.constant 0 : index
    %c1024 = arith.constant 1024 : index
    %57 = vector.load %arg9[%c0_36, %c1024] : memref<1x2048xf32, #tpu.memory_space<vmem>>, vector<1x256xf32>
    tpu.vector_store %arg9[%c0_36, %c1024], %56 {strides = array<i32>} : memref<1x2048xf32, #tpu.memory_space<vmem>>, vector<1x256xf32>,
    %58 = vector.extract_strided_slice %47 {offsets = [5, 0], sizes = [1, 256], strides = [1, 1]} : vector<8x256xf32> to vector<1x256xf32>
    %c0_37 = arith.constant 0 : index
    %c1280 = arith.constant 1280 : index
    %59 = vector.load %arg9[%c0_37, %c1280] : memref<1x2048xf32, #tpu.memory_space<vmem>>, vector<1x256xf32>
    tpu.vector_store %arg9[%c0_37, %c1280], %58 {strides = array<i32>} : memref<1x2048xf32, #tpu.memory_space<vmem>>, vector<1x256xf32>,
    %60 = vector.extract_strided_slice %47 {offsets = [6, 0], sizes = [1, 256], strides = [1, 1]} : vector<8x256xf32> to vector<1x256xf32>
    %c0_38 = arith.constant 0 : index
    %c1536 = arith.constant 1536 : index
    %61 = vector.load %arg9[%c0_38, %c1536] : memref<1x2048xf32, #tpu.memory_space<vmem>>, vector<1x256xf32>
    tpu.vector_store %arg9[%c0_38, %c1536], %60 {strides = array<i32>} : memref<1x2048xf32, #tpu.memory_space<vmem>>, vector<1x256xf32>,
    %62 = vector.extract_strided_slice %47 {offsets = [7, 0], sizes = [1, 256], strides = [1, 1]} : vector<8x256xf32> to vector<1x256xf32>
    %c0_39 = arith.constant 0 : index
    %c1792 = arith.constant 1792 : index
    %63 = vector.load %arg9[%c0_39, %c1792] : memref<1x2048xf32, #tpu.memory_space<vmem>>, vector<1x256xf32>
    tpu.vector_store %arg9[%c0_39, %c1792], %62 {strides = array<i32>} : memref<1x2048xf32, #tpu.memory_space<vmem>>, vector<1x256xf32>,
    %c0_40 = arith.constant 0 : index
    %c0_41 = arith.constant 0 : index
    %64 = vector.load %arg9[%c0_40, %c0_41] : memref<1x2048xf32, #tpu.memory_space<vmem>>, vector<1x2048xf32>
    %c0_42 = arith.constant 0 : index
    %c0_43 = arith.constant 0 : index
    %65 = vector.load %arg5[%c0_42, %c0_43] : memref<2048x10xf32, #tpu.memory_space<vmem>>, vector<2048x10xf32>
    %cst_44 = arith.constant dense<0.000000e+00> : vector<1x10xf32>
    %66 = tpu.matmul %64, %65, %cst_44 {dimension_numbers = #tpu.dot_dimension_numbers<[1], [0], [0], [1], [0, 0, 1, 1], [], []>} : vector<1x2048xf32>, vector<2048x10xf32>, vector<1x10xf32> -> vector<1x10xf32>
    %c0_45 = arith.constant 0 : index
    %c0_46 = arith.constant 0 : index
    %67 = vector.load %arg6[%c0_45, %c0_46] : memref<1x10xf32, #tpu.memory_space<vmem>>, vector<1x10xf32>
    %68 = arith.addf %66, %67 : vector<1x10xf32>
    %c0_47 = arith.constant 0 : index
    %c0_48 = arith.constant 0 : index
    %c0_49 = arith.constant 0 : index
    %69 = vector.load %arg7[%c0_47, %c0_48, %c0_49] : memref<1x1x10xf32, #tpu.memory_space<vmem>>, vector<1x1x10xf32>
    %70 = vector.shape_cast %69 : vector<1x1x10xf32> to vector<1x10xf32>
    %71 = vector.shape_cast %68 : vector<1x10xf32> to vector<1x1x10xf32>
    tpu.vector_store %arg7[%c0_47, %c0_48, %c0_49], %71 {strides = array<i32>} : memref<1x1x10xf32, #tpu.memory_space<vmem>>, vector<1x1x10xf32>,
    return
  }
  func.func @transform_0(%arg0: i32) -> (i32, i32, i32) {
    %c0_i32 = arith.constant 0 : i32
    %c0_i32_0 = arith.constant 0 : i32
    %c0_i32_1 = arith.constant 0 : i32
    return %arg0, %c0_i32, %c0_i32_0 : i32, i32, i32
  }
  func.func @transform_1(%arg0: i32) -> (i32, i32) {
    %c0_i32 = arith.constant 0 : i32
    %c0_i32_0 = arith.constant 0 : i32
    %c0_i32_1 = arith.constant 0 : i32
    return %c0_i32, %c0_i32_0 : i32, i32
  }
  func.func @transform_2(%arg0: i32) -> (i32, i32) {
    %c0_i32 = arith.constant 0 : i32
    %c0_i32_0 = arith.constant 0 : i32
    %c0_i32_1 = arith.constant 0 : i32
    return %c0_i32, %c0_i32_0 : i32, i32
  }
  func.func @transform_3(%arg0: i32) -> (i32, i32) {
    %c0_i32 = arith.constant 0 : i32
    %c0_i32_0 = arith.constant 0 : i32
    %c0_i32_1 = arith.constant 0 : i32
    return %c0_i32, %c0_i32_0 : i32, i32
  }
  func.func @transform_4(%arg0: i32) -> (i32, i32) {
    %c0_i32 = arith.constant 0 : i32
    %c0_i32_0 = arith.constant 0 : i32
    %c0_i32_1 = arith.constant 0 : i32
    return %c0_i32, %c0_i32_0 : i32, i32
  }
  func.func @transform_5(%arg0: i32) -> (i32, i32) {
    %c0_i32 = arith.constant 0 : i32
    %c0_i32_0 = arith.constant 0 : i32
    %c0_i32_1 = arith.constant 0 : i32
    return %c0_i32, %c0_i32_0 : i32, i32
  }
  func.func @transform_6(%arg0: i32) -> (i32, i32, i32) {
    %c0_i32 = arith.constant 0 : i32
    %c0_i32_0 = arith.constant 0 : i32
    %c0_i32_1 = arith.constant 0 : i32
    return %arg0, %c0_i32, %c0_i32_0 : i32, i32, i32
  }
}

</mosaic_0001>

<llo_original>
// kernel: transform_net_forward.1
$region0: #{transform_net_forward.1}
  #allocation0 [shape = 'u32[]', space=smem, size = 0x4, offset = 0x4, fixed_abs, tag = 'smem constant byte address 0x4 - core index']
  #allocation1 [shape = 'u32[144,128]{1,0:T(1,128)}', space=vmem, size = 0x12000, scoped, tag = 'internal scratch']
  #allocation2 [shape = 'f32[8,512]{1,0:T(8,128)}', space=vmem, size = 0x4000, scoped, tag = 'scratch operand']
  #allocation3 [shape = 'f32[1,2048]{1,0:T(1,128)}', space=vmem, size = 0x2000, scoped, tag = 'scratch operand']
  %s0 = inlined_call_operand.vmem [shape: f32[2,4,256], index: 0, kind: input, shape index: {}]
  %s1 = inlined_call_operand.vmem [shape: f32[8,72], index: 1, kind: input, shape index: {}]
  %s2 = inlined_call_operand.vmem [shape: f32[8,256], index: 2, kind: input, shape index: {}]
  %s3 = inlined_call_operand.vmem [shape: f32[9,256], index: 3, kind: input, shape index: {}]
  %s4 = inlined_call_operand.vmem [shape: f32[2048,10], index: 4, kind: input, shape index: {}]
  %s5 = inlined_call_operand.vmem [shape: f32[1,10], index: 5, kind: input, shape index: {}]
  %s6 = inlined_call_operand.hbm [shape: f32[2,1,10], index: 6, kind: output, shape index: {}]
  %s7 = sld [smem:[#allocation0]]
  $region57: #{transform_net_forward.1} parent=0
    _
  %s9 = ssub.s32 1, %s7
  %s10 = scalar_select 0, %s9, %s7
  $region1: #{transform_net_forward.1} parent=0
    #allocation4 [shape = 'u8[1024]{0}', space=vmem, size = 0x400, scoped, tag = 'output window, operand 0']
    #allocation5 [shape = 's32[2]{0}', space=sflag, size = 0x8, scoped, tag = 'scoped memory for transform_net_forward.1']
    %11 = vsyncpa [#allocation5], 0
    %s12 = scalar_lea.sflag [#allocation5], 1
    %13 = vsyncpa %s12, 0
    loop: start=0, step=1, limit=4
    $region2: #{transform_net_forward.1} parent=1 // loop_pre_header
      _
    $region3: #{transform_net_forward.1} parent=1 // loop_header
      %s15 = sphi 0, %s19
      %p16 = scmp.ge.s32.totalorder %s15, 4
      %s25 = sphi 0, %s27
      %s28 = sphi 0, %s25
      %s29 = sphi 0, %s28
      %s45 = sphi 0, %s29
      %s49 = sphi 0, %s49
      %s51 = sphi 0, %s49
      %s52 = sphi 0, %s51
      %s66 = sphi 0, %s52
      %s70 = sphi 0, %s70
      %s72 = sphi 0, %s70
      %s73 = sphi 0, %s72
      %s87 = sphi 0, %s73
      %s91 = sphi 0, %s91
      %s93 = sphi 0, %s91
      %s94 = sphi 0, %s93
      %s108 = sphi 0, %s94
      %s112 = sphi 0, %s112
      %s114 = sphi 0, %s112
      %s115 = sphi 0, %s114
      %s129 = sphi 0, %s115
      %s133 = sphi 0, %s133
      %s135 = sphi 0, %s133
      %s136 = sphi 0, %s135
      %s150 = sphi 0, %s136
      %s156 = sphi 0, %s158
      %s159 = sphi 0, %s156
      %s160 = sphi 0, %s159
      %s176 = sphi 0, %s160
    $region4: #{transform_net_forward.1} parent=1 // loop_header_branch
      %18 = sbr.rel (%p16) target = $region8
    $region5: #{transform_net_forward.1} parent=1 // loop_body
      %s20 = ssub.s32 %s15, 1
      %s21 = ssub.s32 %s15, 2
      %s22 = sadd.s32 %s15, 1
      %s23 = ssub.s32 %s15, %s22
      %p24 = scmp.eq.s32.totalorder %s23, 0
      %s26 = sadd.s32 %s25, 1
      %s27 = scalar_select %p24, %s25, %s26
      %p30 = pneg %p24
      %p31 = scmp.eq.s32.totalorder %s15, 1
      %p32 = por %p30, %p31
      %p33 = scmp.ne.s32.totalorder %s25, %s28
      %p34 = scmp.eq.s32.totalorder %s15, 0
      %p35 = por %p33, %p34
      %p36 = scmp.ne.s32.totalorder %s25, %s28
      %p37 = scmp.eq.s32.totalorder %s20, 1
      %p38 = por %p36, %p37
      %p39 = scmp.ne.s32.totalorder %s28, %s29
      %p40 = scmp.eq.s32.totalorder %s20, 0
      %p41 = por %p39, %p40
      %p42 = scmp.ne.s32.totalorder %s28, %s29
      %p43 = scmp.eq.s32.totalorder %s21, 1
      %p44 = por %p42, %p43
      %p46 = scmp.ne.s32.totalorder %s29, %s45
      %p47 = scmp.eq.s32.totalorder %s21, 0
      %p48 = por %p46, %p47
      %s50 = sadd.s32 %s49, 1
      %p53 = scmp.eq.s32.totalorder %s15, 1
      %p54 = scmp.ne.s32.totalorder %s49, %s51
      %p55 = scmp.eq.s32.totalorder %s15, 0
      %p56 = por %p54, %p55
      %p57 = scmp.ne.s32.totalorder %s49, %s51
      %p58 = scmp.eq.s32.totalorder %s20, 1
      %p59 = por %p57, %p58
      %p60 = scmp.ne.s32.totalorder %s51, %s52
      %p61 = scmp.eq.s32.totalorder %s20, 0
      %p62 = por %p60, %p61
      %p63 = scmp.ne.s32.totalorder %s51, %s52
      %p64 = scmp.eq.s32.totalorder %s21, 1
      %p65 = por %p63, %p64
      %p67 = scmp.ne.s32.totalorder %s52, %s66
      %p68 = scmp.eq.s32.totalorder %s21, 0
      %p69 = por %p67, %p68
      %s71 = sadd.s32 %s70, 1
      %p74 = scmp.eq.s32.totalorder %s15, 1
      %p75 = scmp.ne.s32.totalorder %s70, %s72
      %p76 = scmp.eq.s32.totalorder %s15, 0
      %p77 = por %p75, %p76
      %p78 = scmp.ne.s32.totalorder %s70, %s72
      %p79 = scmp.eq.s32.totalorder %s20, 1
      %p80 = por %p78, %p79
      %p81 = scmp.ne.s32.totalorder %s72, %s73
      %p82 = scmp.eq.s32.totalorder %s20, 0
      %p83 = por %p81, %p82
      %p84 = scmp.ne.s32.totalorder %s72, %s73
      %p85 = scmp.eq.s32.totalorder %s21, 1
      %p86 = por %p84, %p85
      %p88 = scmp.ne.s32.totalorder %s73, %s87
      %p89 = scmp.eq.s32.totalorder %s21, 0
      %p90 = por %p88, %p89
      %s92 = sadd.s32 %s91, 1
      %p95 = scmp.eq.s32.totalorder %s15, 1
      %p96 = scmp.ne.s32.totalorder %s91, %s93
      %p97 = scmp.eq.s32.totalorder %s15, 0
      %p98 = por %p96, %p97
      %p99 = scmp.ne.s32.totalorder %s91, %s93
      %p100 = scmp.eq.s32.totalorder %s20, 1
      %p101 = por %p99, %p100
      %p102 = scmp.ne.s32.totalorder %s93, %s94
      %p103 = scmp.eq.s32.totalorder %s20, 0
      %p104 = por %p102, %p103
      %p105 = scmp.ne.s32.totalorder %s93, %s94
      %p106 = scmp.eq.s32.totalorder %s21, 1
      %p107 = por %p105, %p106
      %p109 = scmp.ne.s32.totalorder %s94, %s108
      %p110 = scmp.eq.s32.totalorder %s21, 0
      %p111 = por %p109, %p110
      %s113 = sadd.s32 %s112, 1
      %p116 = scmp.eq.s32.totalorder %s15, 1
      %p117 = scmp.ne.s32.totalorder %s112, %s114
      %p118 = scmp.eq.s32.totalorder %s15, 0
      %p119 = por %p117, %p118
      %p120 = scmp.ne.s32.totalorder %s112, %s114
      %p121 = scmp.eq.s32.totalorder %s20, 1
      %p122 = por %p120, %p121
      %p123 = scmp.ne.s32.totalorder %s114, %s115
      %p124 = scmp.eq.s32.totalorder %s20, 0
      %p125 = por %p123, %p124
      %p126 = scmp.ne.s32.totalorder %s114, %s115
      %p127 = scmp.eq.s32.totalorder %s21, 1
      %p128 = por %p126, %p127
      %p130 = scmp.ne.s32.totalorder %s115, %s129
      %p131 = scmp.eq.s32.totalorder %s21, 0
      %p132 = por %p130, %p131
      %s134 = sadd.s32 %s133, 1
      %p137 = scmp.eq.s32.totalorder %s15, 1
      %p138 = scmp.ne.s32.totalorder %s133, %s135
      %p139 = scmp.eq.s32.totalorder %s15, 0
      %p140 = por %p138, %p139
      %p141 = scmp.ne.s32.totalorder %s133, %s135
      %p142 = scmp.eq.s32.totalorder %s20, 1
      %p143 = por %p141, %p142
      %p144 = scmp.ne.s32.totalorder %s135, %s136
      %p145 = scmp.eq.s32.totalorder %s20, 0
      %p146 = por %p144, %p145
      %p147 = scmp.ne.s32.totalorder %s135, %s136
      %p148 = scmp.eq.s32.totalorder %s21, 1
      %p149 = por %p147, %p148
      %p151 = scmp.ne.s32.totalorder %s136, %s150
      %p152 = scmp.eq.s32.totalorder %s21, 0
      %p153 = por %p151, %p152
      %s154 = ssub.s32 %s15, %s22
      %p155 = scmp.eq.s32.totalorder %s154, 0
      %s157 = sadd.s32 %s156, 1
      %s158 = scalar_select %p155, %s156, %s157
      %p161 = pneg %p155
      %p162 = scmp.eq.s32.totalorder %s15, 1
      %p163 = por %p161, %p162
      %p164 = scmp.ne.s32.totalorder %s156, %s159
      %p165 = scmp.eq.s32.totalorder %s15, 0
      %p166 = por %p164, %p165
      %p167 = scmp.ne.s32.totalorder %s156, %s159
      %p168 = scmp.eq.s32.totalorder %s20, 1
      %p169 = por %p167, %p168
      %p170 = scmp.ne.s32.totalorder %s159, %s160
      %p171 = scmp.eq.s32.totalorder %s20, 0
      %p172 = por %p170, %p171
      %p173 = scmp.ne.s32.totalorder %s159, %s160
      %p174 = scmp.eq.s32.totalorder %s21, 1
      %p175 = por %p173, %p174
      %p177 = scmp.ne.s32.totalorder %s160, %s176
      %p178 = scmp.eq.s32.totalorder %s21, 0
      %p179 = por %p177, %p178
      %p180 = scmp.le.s32.totalorder 1, %s15
      %p181 = scmp.lt.s32.totalorder %s15, 3
      %p182 = pnand %p180, %p181
      %p183 = pneg %p182
      // Predicated region
      $region9: #{transform_net_forward.1} parent=5 // pred_check
        _
      $region10: #{transform_net_forward.1} parent=5 // pred_check_branch
        %185 = sbr.rel (%p182) target = $region12
      $region11: #{transform_net_forward.1} parent=5 // pred_region
        %s186 = ssub.s32 %s15, 1
        // Predicated region
        $region13: #{transform_net_forward.1} parent=11 // pred_check
          %p187 = pneg %p62
        $region14: #{transform_net_forward.1} parent=11 // pred_check_branch
          %189 = sbr.rel (%p187) target = $region16
        $region15: #{transform_net_forward.1} parent=11 // pred_region
          _
        $region16: #{transform_net_forward.1} parent=11 // pred_fallthru
          _
        // Predicated region
        $region17: #{transform_net_forward.1} parent=11 // pred_check
          %p190 = pneg %p83
        $region18: #{transform_net_forward.1} parent=11 // pred_check_branch
          %192 = sbr.rel (%p190) target = $region20
        $region19: #{transform_net_forward.1} parent=11 // pred_region
          _
        $region20: #{transform_net_forward.1} parent=11 // pred_fallthru
          _
        // Predicated region
        $region21: #{transform_net_forward.1} parent=11 // pred_check
          %p193 = pneg %p104
        $region22: #{transform_net_forward.1} parent=11 // pred_check_branch
          %195 = sbr.rel (%p193) target = $region24
        $region23: #{transform_net_forward.1} parent=11 // pred_region
          _
        $region24: #{transform_net_forward.1} parent=11 // pred_fallthru
          _
        // Predicated region
        $region25: #{transform_net_forward.1} parent=11 // pred_check
          %p196 = pneg %p125
        $region26: #{transform_net_forward.1} parent=11 // pred_check_branch
          %198 = sbr.rel (%p196) target = $region28
        $region27: #{transform_net_forward.1} parent=11 // pred_region
          _
        $region28: #{transform_net_forward.1} parent=11 // pred_fallthru
          _
        // Predicated region
        $region29: #{transform_net_forward.1} parent=11 // pred_check
          %p199 = pneg %p146
        $region30: #{transform_net_forward.1} parent=11 // pred_check_branch
          %201 = sbr.rel (%p199) target = $region32
        $region31: #{transform_net_forward.1} parent=11 // pred_region
          _
        $region32: #{transform_net_forward.1} parent=11 // pred_fallthru
          _
      $region12: #{transform_net_forward.1} parent=5 // pred_fallthru
        _
      %p202 = scmp.lt.s32.totalorder %s15, 2
      // Predicated region
      $region33: #{transform_net_forward.1} parent=5 // pred_check
        %p203 = pneg %p202
      $region34: #{transform_net_forward.1} parent=5 // pred_check_branch
        %205 = sbr.rel (%p203) target = $region36
      $region35: #{transform_net_forward.1} parent=5 // pred_region
        // Predicated region
        $region37: #{transform_net_forward.1} parent=35 // pred_check
          %p206 = pneg %p35
        $region38: #{transform_net_forward.1} parent=35 // pred_check_branch
          %208 = sbr.rel (%p206) target = $region40
        $region39: #{transform_net_forward.1} parent=35 // pred_region
          %p209 = scmp.lt.s32.totalorder %s15, 1
          %s210 = scalar_select %p209, %s15, 1
          %s211 = smul.addr %s210, 2
          %s212 = smul.addr %s211, 4
          %s213 = scalar_lea.vmem %s0, %s212
        $region40: #{transform_net_forward.1} parent=35 // pred_fallthru
          _
      $region36: #{transform_net_forward.1} parent=5 // pred_fallthru
        _
      %p214 = scmp.le.s32.totalorder 1, %s15
      %p215 = scmp.lt.s32.totalorder %s15, 3
      %p216 = pnand %p214, %p215
      %p217 = pneg %p216
      // Predicated region
      $region41: #{transform_net_forward.1} parent=5 // pred_check
        _
      $region42: #{transform_net_forward.1} parent=5 // pred_check_branch
        %219 = sbr.rel (%p216) target = $region44
      $region43: #{transform_net_forward.1} parent=5 // pred_region
        %s220 = ssub.s32 %s15, 1
        %p221 = scmp.lt.s32.totalorder %s20, 1
        %s222 = scalar_select %p221, %s20, 1
        %s223 = smul.addr %s222, 2
        %s224 = smul.addr %s223, 4
        %s225 = scalar_lea.vmem %s0, %s224
        %p226 = pneg %p41
        %p227 = pneg %p38
        %p228 = pneg %p62
        %p229 = pneg %p59
        %p230 = pneg %p83
        %p231 = pneg %p80
        %p232 = pneg %p104
        %p233 = pneg %p101
        %p234 = pneg %p125
        %p235 = pneg %p122
        %p236 = pneg %p146
        %p237 = pneg %p143
        %p238 = pneg %p172
        %p239 = pneg %p169
        %s240 = sand.u32 %s159, 1
        %s241 = scalar_lea.sflag [#allocation5], %s240
        %s242 = sand.u32 %s159, 1
        %s243 = scalar_lea.vmem [#allocation4], %s242
        %p244 = scmp.lt.s32.totalorder %s20, 1
        %s245 = scalar_select %p244, %s20, 1
        %s246 = smul.addr %s245, 2
        %s247 = smul.addr %s246, 4
        %s248 = scalar_lea.vmem %s0, %s247
        %249 = vst [vmem:[#allocation2] sm:$0xff] 0.0
        %250 = vst [vmem:[#allocation2 + $0x8] sm:$0xff] 0.0
        %251 = vst [vmem:[#allocation2 + $0x10] sm:$0xff] 0.0
        %252 = vst [vmem:[#allocation2 + $0x18] sm:$0xff] 0.0
        %v253 = vld [vmem:[%s248] sm:$0xff]
        %v255 = vcombine.high %v253, %v253
        %257 = vst [vmem:[#allocation2 + $0x8] sm:$0xf] %v253
        %258 = vst [vmem:[#allocation2 + $0x10] sm:$0xf] %v255
        %v259 = vld [vmem:[#allocation2] sm:$0xff]
        %v260 = vld [vmem:[#allocation2 + $0x8] sm:$0xff]
        %v261 = vld [vmem:[#allocation2 + $0x10] sm:$0xff]
        %v262 = vld [vmem:[%s3] ss:$8 sm:$0x3]
        %v264 = vlaneseq
        %v265 = vshrl.u32 %v264, 7
        %v266 = vsub.s32 0, %v265
        %v267 = vrot.slane %v262, %v266
        %v268 = vlaneseq
        %v269 = vshrl.u32 %v268, 7
        %v270 = vsub.s32 1, %v269
        %v271 = vrot.slane %v262, %v270
        %272 = vrot.lane.b32.xlu0 %v267, 111
        %v273 = vpop.permute.xlu0 %272
        %274 = vrot.lane.b32.xlu0 %v271, 111
        %v275 = vpop.permute.xlu0 %274
        %vm276 = vcmask 908288
        %v277 = vsel %vm276, %v273, %v275
        %v281 = vmul.f32 %v259, %v273
        %v282 = vmul.f32 %v260, %v277
        %v283 = vmul.f32 %v261, %v275
        %s284 = scalar_lea.vmem %s3, 1
        %v285 = vld [vmem:[%s284] ss:$8 sm:$0x3]
        %v287 = vlaneseq
        %v288 = vshrl.u32 %v287, 7
        %v289 = vsub.s32 0, %v288
        %v290 = vrot.slane %v285, %v289
        %v291 = vlaneseq
        %v292 = vshrl.u32 %v291, 7
        %v293 = vsub.s32 1, %v292
        %v294 = vrot.slane %v285, %v293
        %295 = vrot.lane.b32.xlu0 %v290, 112
        %v296 = vpop.permute.xlu0 %295
        %297 = vrot.lane.b32.xlu0 %v294, 112
        %v298 = vpop.permute.xlu0 %297
        %vm299 = vcmask 916480
        %v300 = vsel %vm299, %v296, %v298
        %v304 = vmul.f32 %v259, %v296
        %v305 = vmul.f32 %v260, %v300
        %v306 = vmul.f32 %v261, %v298
        %s307 = scalar_lea.vmem %s3, 2
        %v308 = vld [vmem:[%s307] ss:$8 sm:$0x3]
        %v310 = vlaneseq
        %v311 = vshrl.u32 %v310, 7
        %v312 = vsub.s32 0, %v311
        %v313 = vrot.slane %v308, %v312
        %v314 = vlaneseq
        %v315 = vshrl.u32 %v314, 7
        %v316 = vsub.s32 1, %v315
        %v317 = vrot.slane %v308, %v316
        %318 = vrot.lane.b32.xlu0 %v313, 113
        %v319 = vpop.permute.xlu0 %318
        %320 = vrot.lane.b32.xlu0 %v317, 113
        %v321 = vpop.permute.xlu0 %320
        %vm322 = vcmask 924672
        %v323 = vsel %vm322, %v319, %v321
        %v327 = vmul.f32 %v259, %v319
        %v328 = vmul.f32 %v260, %v323
        %v329 = vmul.f32 %v261, %v321
        %s330 = scalar_lea.vmem %s3, 3
        %v331 = vld [vmem:[%s330] ss:$8 sm:$0x3]
        %v333 = vlaneseq
        %v334 = vshrl.u32 %v333, 7
        %v335 = vsub.s32 0, %v334
        %v336 = vrot.slane %v331, %v335
        %v337 = vlaneseq
        %v338 = vshrl.u32 %v337, 7
        %v339 = vsub.s32 1, %v338
        %v340 = vrot.slane %v331, %v339
        %341 = vrot.lane.b32.xlu0 %v336, 127
        %v342 = vpop.permute.xlu0 %341
        %343 = vrot.lane.b32.xlu0 %v340, 127
        %v344 = vpop.permute.xlu0 %343
        %vm345 = vcmask 1039360
        %v346 = vsel %vm345, %v342, %v344
        %v350 = vmul.f32 %v259, %v342
        %v351 = vmul.f32 %v260, %v346
        %v352 = vmul.f32 %v261, %v344
        %s353 = scalar_lea.vmem %s3, 4
        %v354 = vld [vmem:[%s353] ss:$8 sm:$0x3]
        %v356 = vlaneseq
        %v357 = vshrl.u32 %v356, 7
        %v358 = vsub.s32 0, %v357
        %v359 = vrot.slane %v354, %v358
        %v360 = vlaneseq
        %v361 = vshrl.u32 %v360, 7
        %v362 = vsub.s32 1, %v361
        %v363 = vrot.slane %v354, %v362
        %v366 = vmul.f32 %v260, %v359
        %v367 = vmul.f32 %v261, %v363
        %v368 = vld [vmem:[#allocation2 + $0x8] sm:$0xff]
        %v369 = vld [vmem:[#allocation2 + $0x10] sm:$0xff]
        %v370 = vld [vmem:[#allocation2 + $0x18] sm:$0xff]
        %s371 = scalar_lea.vmem %s3, 5
        %v372 = vld [vmem:[%s371] ss:$8 sm:$0x3]
        %v374 = vlaneseq
        %v375 = vshrl.u32 %v374, 7
        %v376 = vsub.s32 0, %v375
        %v377 = vrot.slane %v372, %v376
        %v378 = vlaneseq
        %v379 = vshrl.u32 %v378, 7
        %v380 = vsub.s32 1, %v379
        %v381 = vrot.slane %v372, %v380
        %382 = vrot.lane.b32.xlu0 %v377, 1
        %v383 = vpop.permute.xlu0 %382
        %384 = vrot.lane.b32.xlu0 %v381, 1
        %v385 = vpop.permute.xlu0 %384
        %vm386 = vcmask 7168
        %v387 = vsel %vm386, %v383, %v385
        %v391 = vmul.f32 %v368, %v383
        %v392 = vmul.f32 %v369, %v387
        %v393 = vmul.f32 %v370, %v385
        %s394 = scalar_lea.vmem %s3, 6
        %v395 = vld [vmem:[%s394] ss:$8 sm:$0x3]
        %v397 = vlaneseq
        %v398 = vshrl.u32 %v397, 7
        %v399 = vsub.s32 0, %v398
        %v400 = vrot.slane %v395, %v399
        %v401 = vlaneseq
        %v402 = vshrl.u32 %v401, 7
        %v403 = vsub.s32 1, %v402
        %v404 = vrot.slane %v395, %v403
        %405 = vrot.lane.b32.xlu0 %v400, 15
        %v406 = vpop.permute.xlu0 %405
        %407 = vrot.lane.b32.xlu0 %v404, 15
        %v408 = vpop.permute.xlu0 %407
        %vm409 = vcmask 121856
        %v410 = vsel %vm409, %v406, %v408
        %v414 = vmul.f32 %v368, %v406
        %v415 = vmul.f32 %v369, %v410
        %v416 = vmul.f32 %v370, %v408
        %s417 = scalar_lea.vmem %s3, 7
        %v418 = vld [vmem:[%s417] ss:$8 sm:$0x3]
        %v420 = vlaneseq
        %v421 = vshrl.u32 %v420, 7
        %v422 = vsub.s32 0, %v421
        %v423 = vrot.slane %v418, %v422
        %v424 = vlaneseq
        %v425 = vshrl.u32 %v424, 7
        %v426 = vsub.s32 1, %v425
        %v427 = vrot.slane %v418, %v426
        %428 = vrot.lane.b32.xlu0 %v423, 16
        %v429 = vpop.permute.xlu0 %428
        %430 = vrot.lane.b32.xlu0 %v427, 16
        %v431 = vpop.permute.xlu0 %430
        %vm432 = vcmask 130048
        %v433 = vsel %vm432, %v429, %v431
        %v437 = vmul.f32 %v368, %v429
        %v438 = vmul.f32 %v369, %v433
        %v439 = vmul.f32 %v370, %v431
        %s440 = scalar_lea.vmem %s3, 16
        %v441 = vld [vmem:[%s440] ss:$8 sm:$0x3]
        %v443 = vlaneseq
        %v444 = vshrl.u32 %v443, 7
        %v445 = vsub.s32 0, %v444
        %v446 = vrot.slane %v441, %v445
        %v447 = vlaneseq
        %v448 = vshrl.u32 %v447, 7
        %v449 = vsub.s32 1, %v448
        %v450 = vrot.slane %v441, %v449
        %451 = vrot.lane.b32.xlu0 %v446, 17
        %v452 = vpop.permute.xlu0 %451
        %453 = vrot.lane.b32.xlu0 %v450, 17
        %v454 = vpop.permute.xlu0 %453
        %vm455 = vcmask 138240
        %v456 = vsel %vm455, %v452, %v454
        %v460 = vmul.f32 %v368, %v452
        %v461 = vmul.f32 %v369, %v456
        %v462 = vmul.f32 %v370, %v454
        %466 = vrot.lane.b32.xlu0 %v304, 127
        %v467 = vpop.permute.xlu0 %466
        %468 = vrot.lane.b32.xlu0 %v305, 127
        %v469 = vpop.permute.xlu0 %468
        %470 = vrot.lane.b32.xlu0 %v306, 127
        %v471 = vpop.permute.xlu0 %470
        %v472 = vsel %vm345, %v467, %v469
        %v473 = vsel %vm345, %v469, %v471
        %477 = vrot.lane.b32.xlu0 %v327, 126
        %v478 = vpop.permute.xlu0 %477
        %479 = vrot.lane.b32.xlu0 %v328, 126
        %v480 = vpop.permute.xlu0 %479
        %481 = vrot.lane.b32.xlu0 %v329, 126
        %v482 = vpop.permute.xlu0 %481
        %vm483 = vcmask 1031168
        %v484 = vsel %vm483, %v478, %v480
        %v485 = vsel %vm483, %v480, %v482
        %489 = vrot.lane.b32.xlu0 %v350, 112
        %v490 = vpop.permute.xlu0 %489
        %491 = vrot.lane.b32.xlu0 %v351, 112
        %v492 = vpop.permute.xlu0 %491
        %493 = vrot.lane.b32.xlu0 %v352, 112
        %v494 = vpop.permute.xlu0 %493
        %v495 = vsel %vm299, %v490, %v492
        %v496 = vsel %vm299, %v492, %v494
        %499 = vrot.lane.b32.xlu0 %v366, 111
        %v500 = vpop.permute.xlu0 %499
        %501 = vrot.lane.b32.xlu0 %v367, 111
        %v502 = vpop.permute.xlu0 %501
        %v503 = vsel %vm276, %v500, %v502
        %507 = vrot.lane.b32.xlu0 %v391, 110
        %v508 = vpop.permute.xlu0 %507
        %509 = vrot.lane.b32.xlu0 %v392, 110
        %v510 = vpop.permute.xlu0 %509
        %511 = vrot.lane.b32.xlu0 %v393, 110
        %v512 = vpop.permute.xlu0 %511
        %vm513 = vcmask 900096
        %v514 = vsel %vm513, %v508, %v510
        %v515 = vsel %vm513, %v510, %v512
        %519 = vrot.lane.b32.xlu0 %v414, 96
        %v520 = vpop.permute.xlu0 %519
        %521 = vrot.lane.b32.xlu0 %v415, 96
        %v522 = vpop.permute.xlu0 %521
        %523 = vrot.lane.b32.xlu0 %v416, 96
        %v524 = vpop.permute.xlu0 %523
        %vm525 = vcmask 785408
        %v526 = vsel %vm525, %v520, %v522
        %v527 = vsel %vm525, %v522, %v524
        %531 = vrot.lane.b32.xlu0 %v437, 95
        %v532 = vpop.permute.xlu0 %531
        %533 = vrot.lane.b32.xlu0 %v438, 95
        %v534 = vpop.permute.xlu0 %533
        %535 = vrot.lane.b32.xlu0 %v439, 95
        %v536 = vpop.permute.xlu0 %535
        %vm537 = vcmask 777216
        %v538 = vsel %vm537, %v532, %v534
        %v539 = vsel %vm537, %v534, %v536
        %543 = vrot.lane.b32.xlu0 %v460, 94
        %v544 = vpop.permute.xlu0 %543
        %545 = vrot.lane.b32.xlu0 %v461, 94
        %v546 = vpop.permute.xlu0 %545
        %547 = vrot.lane.b32.xlu0 %v462, 94
        %v548 = vpop.permute.xlu0 %547
        %vm549 = vcmask 769024
        %v550 = vsel %vm549, %v544, %v546
        %v551 = vsel %vm549, %v546, %v548
        %v552 = vld [vmem:[%s1] sm:$0xff]
        %v553 = vld [vmem:[%s2] sm:$0xff]
        %v554 = vld [vmem:[%s2 + $0x8] sm:$0xff]
        %558 = vrot.lane.b32.xlu0 %v281, 17
        %v559 = vpop.permute.xlu0 %558
        %560 = vrot.lane.b32.xlu0 %v282, 17
        %v561 = vpop.permute.xlu0 %560
        %562 = vrot.lane.b32.xlu0 %v283, 17
        %v563 = vpop.permute.xlu0 %562
        %564 = vrot.lane.b32.xlu0 %v472, 17
        %v565 = vpop.permute.xlu0 %564
        %566 = vrot.lane.b32.xlu0 %v473, 17
        %v567 = vpop.permute.xlu0 %566
        %568 = vrot.lane.b32.xlu0 %v471, 17
        %v569 = vpop.permute.xlu0 %568
        %570 = vrot.lane.b32.xlu0 %v484, 17
        %v571 = vpop.permute.xlu0 %570
        %572 = vrot.lane.b32.xlu0 %v485, 17
        %v573 = vpop.permute.xlu0 %572
        %574 = vrot.lane.b32.xlu0 %v482, 17
        %v575 = vpop.permute.xlu0 %574
        %576 = vrot.lane.b32.xlu0 %v495, 17
        %v577 = vpop.permute.xlu0 %576
        %578 = vrot.lane.b32.xlu0 %v496, 17
        %v579 = vpop.permute.xlu0 %578
        %580 = vrot.lane.b32.xlu0 %v494, 17
        %v581 = vpop.permute.xlu0 %580
        %582 = vrot.lane.b32.xlu0 %v500, 17
        %v583 = vpop.permute.xlu0 %582
        %584 = vrot.lane.b32.xlu0 %v503, 17
        %v585 = vpop.permute.xlu0 %584
        %586 = vrot.lane.b32.xlu0 %v502, 17
        %v587 = vpop.permute.xlu0 %586
        %588 = vrot.lane.b32.xlu0 %v508, 17
        %v589 = vpop.permute.xlu0 %588
        %590 = vrot.lane.b32.xlu0 %v514, 17
        %v591 = vpop.permute.xlu0 %590
        %592 = vrot.lane.b32.xlu0 %v515, 17
        %v593 = vpop.permute.xlu0 %592
        %594 = vrot.lane.b32.xlu0 %v520, 17
        %v595 = vpop.permute.xlu0 %594
        %596 = vrot.lane.b32.xlu0 %v526, 17
        %v597 = vpop.permute.xlu0 %596
        %598 = vrot.lane.b32.xlu0 %v527, 17
        %v599 = vpop.permute.xlu0 %598
        %600 = vrot.lane.b32.xlu0 %v532, 17
        %v601 = vpop.permute.xlu0 %600
        %602 = vrot.lane.b32.xlu0 %v538, 17
        %v603 = vpop.permute.xlu0 %602
        %604 = vrot.lane.b32.xlu0 %v539, 17
        %v605 = vpop.permute.xlu0 %604
        %606 = vrot.lane.b32.xlu0 %v544, 17
        %v607 = vpop.permute.xlu0 %606
        %608 = vrot.lane.b32.xlu0 %v550, 17
        %v609 = vpop.permute.xlu0 %608
        %610 = vrot.lane.b32.xlu0 %v551, 17
        %v611 = vpop.permute.xlu0 %610
        %v612 = vsel %vm455, %v559, %v561
        %v613 = vsel %vm455, %v561, %v563
        %v614 = vsel %vm455, %v565, %v567
        %v615 = vsel %vm455, %v567, %v569
        %v616 = vsel %vm455, %v571, %v573
        %v617 = vsel %vm455, %v573, %v575
        %v618 = vsel %vm455, %v577, %v579
        %v619 = vsel %vm455, %v579, %v581
        %v620 = vsel %vm455, %v583, %v585
        %v621 = vsel %vm455, %v585, %v587
        %v622 = vsel %vm455, %v589, %v591
        %v623 = vsel %vm455, %v591, %v593
        %v624 = vsel %vm455, %v595, %v597
        %v625 = vsel %vm455, %v597, %v599
        %v626 = vsel %vm455, %v601, %v603
        %v627 = vsel %vm455, %v603, %v605
        %v628 = vsel %vm455, %v607, %v609
        %v629 = vsel %vm455, %v609, %v611
        %vm648 = vcmask 588800
        %v650 = vsel %vm648, %v552, 0
        %652 = vmatprep.subr.mxu0 0.0
        %653 = vmatpush1.msra.mxu0 0.0
        %654 = vmatprep.subr.mxu0 0.0
        %655 = vmatpush1.msra.mxu0 0.0
        %656 = vmatprep.subr.mxu0 0.0
        %657 = vmatpush1.msra.mxu0 0.0
        %658 = vmatprep.subr.mxu0 0.0
        %659 = vmatpush1.msra.mxu0 0.0
        %660 = vmatprep.subr.mxu0 0.0
        %661 = vmatpush1.msra.mxu0 0.0
        %662 = vmatprep.subr.mxu0 0.0
        %663 = vmatpush1.msra.mxu0 0.0
        %664 = vmatprep.subr.mxu0 0.0
        %665 = vmatpush1.msra.mxu0 0.0
        %666 = vmatprep.subr.mxu0 %v629
        %667 = vmatpush1.msra.mxu0 %v628
        %668 = vmatprep.subr.mxu0 %v627
        %669 = vmatpush1.msra.mxu0 %v626
        %670 = vmatprep.subr.mxu0 %v625
        %671 = vmatpush1.msra.mxu0 %v624
        %672 = vmatprep.subr.mxu0 %v623
        %673 = vmatpush1.msra.mxu0 %v622
        %674 = vmatprep.subr.mxu0 %v621
        %675 = vmatpush1.msra.mxu0 %v620
        %676 = vmatprep.subr.mxu0 %v619
        %677 = vmatpush1.msra.mxu0 %v618
        %678 = vmatprep.subr.mxu0 %v617
        %679 = vmatpush1.msra.mxu0 %v616
        %680 = vmatprep.subr.mxu0 %v615
        %681 = vmatpush1.msra.mxu0 %v614
        %682 = vmatprep.subr.mxu0 %v613
        %683 = vmatpush1.msra.mxu0 %v612
        %684 = vmatprep.subr.mxu0 0.0
        %685 = vmatpush2.msra.mxu0 0.0
        %686 = vmatprep.subr.mxu0 0.0
        %687 = vmatpush2.msra.mxu0 0.0
        %688 = vmatprep.subr.mxu0 0.0
        %689 = vmatpush2.msra.mxu0 0.0
        %690 = vmatprep.subr.mxu0 0.0
        %691 = vmatpush2.msra.mxu0 0.0
        %692 = vmatprep.subr.mxu0 0.0
        %693 = vmatpush2.msra.mxu0 0.0
        %694 = vmatprep.subr.mxu0 0.0
        %695 = vmatpush2.msra.mxu0 0.0
        %696 = vmatprep.subr.mxu0 0.0
        %697 = vmatpush2.msra.mxu0 0.0
        %698 = vmatprep.subr.mxu0 0.0
        %699 = vmatpush2.msra.mxu0 0.0
        %700 = vmatprep.subr.mxu0 0.0
        %701 = vmatpush2.msra.mxu0 0.0
        %702 = vmatprep.subr.mxu0 0.0
        %703 = vmatpush2.msra.mxu0 0.0
        %704 = vmatprep.subr.mxu0 0.0
        %705 = vmatpush2.msra.mxu0 0.0
        %706 = vmatprep.subr.mxu0 0.0
        %707 = vmatpush2.msra.mxu0 0.0
        %708 = vmatprep.subr.mxu0 0.0
        %709 = vmatpush2.msra.mxu0 0.0
        %710 = vmatprep.subr.mxu0 0.0
        %711 = vmatpush2.msra.mxu0 0.0
        %712 = vmatprep.subr.mxu0 0.0
        %713 = vmatpush2.msra.mxu0 0.0
        %714 = vmatprep.subr.mxu0 0.0
        %715 = vmatpush2.msra.mxu0 0.0
        %716 = vmatprep.mubr.f32.mxu0 0.0
        %717 = vmatmul.mubr.f32.gmra.mxu0 %v650
        %v718 = vpop.f32.mrf.mxu0
        %v719 = vadd.f32 %v553, %v718
        %v720 = vpop.f32.mrf.mxu0
        %v721 = vadd.f32 %v554, %v720
        %722 = vdwg.mxu0
        %v723 = vmax.f32 %v719, 0.0
        %v724 = vmax.f32 %v721, 0.0
        %v727 = vcombine.low %v723, %v724
        %v729 = vunpack.c.l.s4 1966171168
        %v730 = vunpack.c.0.s8 %v729
        %v731 = vlaneseq
        %v732 = vshrl.u32 %v731, 7
        %v733 = vsub.s32 %v730, %v732
        %v734 = vrot.slane %v727, %v733
        %v736 = vunpack.c.l.s4 1966171168
        %v737 = vunpack.c.0.s8 %v736
        %v738 = vlaneseq
        %v739 = vshrl.u32 %v738, 7
        %v740 = vsub.s32 %v737, %v739
        %v741 = vrot.slane %v734, %v740
        %v743 = vlaneseq
        %vm744 = vcmp.ge.s32.totalorder %v743, 0
        %vm745 = vcmp.lt.s32.totalorder %v743, 256
        %vm746 = vmand %vm744, %vm745
        %747 = vst.msk [vmem:[#allocation3] sm:$0x3] %vm746, %v741
        %v748 = vcombine.high %v734, %v734
        %v750 = vunpack.c.l.s4 1966171168
        %v751 = vunpack.c.0.s8 %v750
        %v752 = vlaneseq
        %v753 = vshrl.u32 %v752, 7
        %v754 = vsub.s32 %v751, %v753
        %v755 = vrot.slane %v748, %v754
        %757 = vst.msk [vmem:[#allocation3 + $0x2] sm:$0x3] %vm746, %v755
        %v758 = vcombine.high %v741, %v741
        %760 = vst.msk [vmem:[#allocation3 + $0x4] sm:$0x3] %vm746, %v758
        %v761 = vcombine.high %v755, %v755
        %763 = vst.msk [vmem:[#allocation3 + $0x6] sm:$0x3] %vm746, %v761
        %v764 = vcombine.high %v723, %v724
        %v766 = vunpack.c.l.s4 1966171168
        %v767 = vunpack.c.0.s8 %v766
        %v768 = vlaneseq
        %v769 = vshrl.u32 %v768, 7
        %v770 = vsub.s32 %v767, %v769
        %v771 = vrot.slane %v764, %v770
        %v773 = vunpack.c.l.s4 1966171168
        %v774 = vunpack.c.0.s8 %v773
        %v775 = vlaneseq
        %v776 = vshrl.u32 %v775, 7
        %v777 = vsub.s32 %v774, %v776
        %v778 = vrot.slane %v771, %v777
        %780 = vst.msk [vmem:[#allocation3 + $0x8] sm:$0x3] %vm746, %v778
        %v781 = vcombine.high %v771, %v771
        %v783 = vunpack.c.l.s4 1966171168
        %v784 = vunpack.c.0.s8 %v783
        %v785 = vlaneseq
        %v786 = vshrl.u32 %v785, 7
        %v787 = vsub.s32 %v784, %v786
        %v788 = vrot.slane %v781, %v787
        %790 = vst.msk [vmem:[#allocation3 + $0xa] sm:$0x3] %vm746, %v788
        %v791 = vcombine.high %v778, %v778
        %793 = vst.msk [vmem:[#allocation3 + $0xc] sm:$0x3] %vm746, %v791
        %v794 = vcombine.high %v788, %v788
        %796 = vst.msk [vmem:[#allocation3 + $0xe] sm:$0x3] %vm746, %v794
        %v797 = vld [vmem:[#allocation3] sm:$0xff]
        %v798 = vld [vmem:[#allocation3 + $0x8] sm:$0xff]
        %v799 = vld [vmem:[%s4] sm:$0xff]
        %v800 = vld [vmem:[%s4 + $0x8] sm:$0xff]
        %v801 = vld [vmem:[%s4 + $0x10] sm:$0xff]
        %v802 = vld [vmem:[%s4 + $0x18] sm:$0xff]
        %v803 = vld [vmem:[%s4 + $0x20] sm:$0xff]
        %v804 = vld [vmem:[%s4 + $0x28] sm:$0xff]
        %v805 = vld [vmem:[%s4 + $0x30] sm:$0xff]
        %v806 = vld [vmem:[%s4 + $0x38] sm:$0xff]
        %v807 = vld [vmem:[%s4 + $0x40] sm:$0xff]
        %v808 = vld [vmem:[%s4 + $0x48] sm:$0xff]
        %v809 = vld [vmem:[%s4 + $0x50] sm:$0xff]
        %v810 = vld [vmem:[%s4 + $0x58] sm:$0xff]
        %v811 = vld [vmem:[%s4 + $0x60] sm:$0xff]
        %v812 = vld [vmem:[%s4 + $0x68] sm:$0xff]
        %v813 = vld [vmem:[%s4 + $0x70] sm:$0xff]
        %v814 = vld [vmem:[%s4 + $0x78] sm:$0xff]
        %v815 = vld [vmem:[%s4 + $0x80] sm:$0xff]
        %v816 = vld [vmem:[%s4 + $0x88] sm:$0xff]
        %v817 = vld [vmem:[%s4 + $0x90] sm:$0xff]
        %v818 = vld [vmem:[%s4 + $0x98] sm:$0xff]
        %v819 = vld [vmem:[%s4 + $0xa0] sm:$0xff]
        %v820 = vld [vmem:[%s4 + $0xa8] sm:$0xff]
        %v821 = vld [vmem:[%s4 + $0xb0] sm:$0xff]
        %v822 = vld [vmem:[%s4 + $0xb8] sm:$0xff]
        %v823 = vld [vmem:[%s4 + $0xc0] sm:$0xff]
        %v824 = vld [vmem:[%s4 + $0xc8] sm:$0xff]
        %v825 = vld [vmem:[%s4 + $0xd0] sm:$0xff]
        %v826 = vld [vmem:[%s4 + $0xd8] sm:$0xff]
        %v827 = vld [vmem:[%s4 + $0xe0] sm:$0xff]
        %v828 = vld [vmem:[%s4 + $0xe8] sm:$0xff]
        %v829 = vld [vmem:[%s4 + $0xf0] sm:$0xff]
        %v830 = vld [vmem:[%s4 + $0xf8] sm:$0xff]
        %v831 = vld [vmem:[%s4 + $0x100] sm:$0xff]
        %v832 = vld [vmem:[%s4 + $0x108] sm:$0xff]
        %v833 = vld [vmem:[%s4 + $0x110] sm:$0xff]
        %v834 = vld [vmem:[%s4 + $0x118] sm:$0xff]
        %v835 = vld [vmem:[%s4 + $0x120] sm:$0xff]
        %v836 = vld [vmem:[%s4 + $0x128] sm:$0xff]
        %v837 = vld [vmem:[%s4 + $0x130] sm:$0xff]
        %v838 = vld [vmem:[%s4 + $0x138] sm:$0xff]
        %v839 = vld [vmem:[%s4 + $0x140] sm:$0xff]
        %v840 = vld [vmem:[%s4 + $0x148] sm:$0xff]
        %v841 = vld [vmem:[%s4 + $0x150] sm:$0xff]
        %v842 = vld [vmem:[%s4 + $0x158] sm:$0xff]
        %v843 = vld [vmem:[%s4 + $0x160] sm:$0xff]
        %v844 = vld [vmem:[%s4 + $0x168] sm:$0xff]
        %v845 = vld [vmem:[%s4 + $0x170] sm:$0xff]
        %v846 = vld [vmem:[%s4 + $0x178] sm:$0xff]
        %v847 = vld [vmem:[%s4 + $0x180] sm:$0xff]
        %v848 = vld [vmem:[%s4 + $0x188] sm:$0xff]
        %v849 = vld [vmem:[%s4 + $0x190] sm:$0xff]
        %v850 = vld [vmem:[%s4 + $0x198] sm:$0xff]
        %v851 = vld [vmem:[%s4 + $0x1a0] sm:$0xff]
        %v852 = vld [vmem:[%s4 + $0x1a8] sm:$0xff]
        %v853 = vld [vmem:[%s4 + $0x1b0] sm:$0xff]
        %v854 = vld [vmem:[%s4 + $0x1b8] sm:$0xff]
        %v855 = vld [vmem:[%s4 + $0x1c0] sm:$0xff]
        %v856 = vld [vmem:[%s4 + $0x1c8] sm:$0xff]
        %v857 = vld [vmem:[%s4 + $0x1d0] sm:$0xff]
        %v858 = vld [vmem:[%s4 + $0x1d8] sm:$0xff]
        %v859 = vld [vmem:[%s4 + $0x1e0] sm:$0xff]
        %v860 = vld [vmem:[%s4 + $0x1e8] sm:$0xff]
        %v861 = vld [vmem:[%s4 + $0x1f0] sm:$0xff]
        %v862 = vld [vmem:[%s4 + $0x1f8] sm:$0xff]
        %v863 = vld [vmem:[%s4 + $0x200] sm:$0xff]
        %v864 = vld [vmem:[%s4 + $0x208] sm:$0xff]
        %v865 = vld [vmem:[%s4 + $0x210] sm:$0xff]
        %v866 = vld [vmem:[%s4 + $0x218] sm:$0xff]
        %v867 = vld [vmem:[%s4 + $0x220] sm:$0xff]
        %v868 = vld [vmem:[%s4 + $0x228] sm:$0xff]
        %v869 = vld [vmem:[%s4 + $0x230] sm:$0xff]
        %v870 = vld [vmem:[%s4 + $0x238] sm:$0xff]
        %v871 = vld [vmem:[%s4 + $0x240] sm:$0xff]
        %v872 = vld [vmem:[%s4 + $0x248] sm:$0xff]
        %v873 = vld [vmem:[%s4 + $0x250] sm:$0xff]
        %v874 = vld [vmem:[%s4 + $0x258] sm:$0xff]
        %v875 = vld [vmem:[%s4 + $0x260] sm:$0xff]
        %v876 = vld [vmem:[%s4 + $0x268] sm:$0xff]
        %v877 = vld [vmem:[%s4 + $0x270] sm:$0xff]
        %v878 = vld [vmem:[%s4 + $0x278] sm:$0xff]
        %v879 = vld [vmem:[%s4 + $0x280] sm:$0xff]
        %v880 = vld [vmem:[%s4 + $0x288] sm:$0xff]
        %v881 = vld [vmem:[%s4 + $0x290] sm:$0xff]
        %v882 = vld [vmem:[%s4 + $0x298] sm:$0xff]
        %v883 = vld [vmem:[%s4 + $0x2a0] sm:$0xff]
        %v884 = vld [vmem:[%s4 + $0x2a8] sm:$0xff]
        %v885 = vld [vmem:[%s4 + $0x2b0] sm:$0xff]
        %v886 = vld [vmem:[%s4 + $0x2b8] sm:$0xff]
        %v887 = vld [vmem:[%s4 + $0x2c0] sm:$0xff]
        %v888 = vld [vmem:[%s4 + $0x2c8] sm:$0xff]
        %v889 = vld [vmem:[%s4 + $0x2d0] sm:$0xff]
        %v890 = vld [vmem:[%s4 + $0x2d8] sm:$0xff]
        %v891 = vld [vmem:[%s4 + $0x2e0] sm:$0xff]
        %v892 = vld [vmem:[%s4 + $0x2e8] sm:$0xff]
        %v893 = vld [vmem:[%s4 + $0x2f0] sm:$0xff]
        %v894 = vld [vmem:[%s4 + $0x2f8] sm:$0xff]
        %v895 = vld [vmem:[%s4 + $0x300] sm:$0xff]
        %v896 = vld [vmem:[%s4 + $0x308] sm:$0xff]
        %v897 = vld [vmem:[%s4 + $0x310] sm:$0xff]
        %v898 = vld [vmem:[%s4 + $0x318] sm:$0xff]
        %v899 = vld [vmem:[%s4 + $0x320] sm:$0xff]
        %v900 = vld [vmem:[%s4 + $0x328] sm:$0xff]
        %v901 = vld [vmem:[%s4 + $0x330] sm:$0xff]
        %v902 = vld [vmem:[%s4 + $0x338] sm:$0xff]
        %v903 = vld [vmem:[%s4 + $0x340] sm:$0xff]
        %v904 = vld [vmem:[%s4 + $0x348] sm:$0xff]
        %v905 = vld [vmem:[%s4 + $0x350] sm:$0xff]
        %v906 = vld [vmem:[%s4 + $0x358] sm:$0xff]
        %v907 = vld [vmem:[%s4 + $0x360] sm:$0xff]
        %v908 = vld [vmem:[%s4 + $0x368] sm:$0xff]
        %v909 = vld [vmem:[%s4 + $0x370] sm:$0xff]
        %v910 = vld [vmem:[%s4 + $0x378] sm:$0xff]
        %v911 = vld [vmem:[%s4 + $0x380] sm:$0xff]
        %v912 = vld [vmem:[%s4 + $0x388] sm:$0xff]
        %v913 = vld [vmem:[%s4 + $0x390] sm:$0xff]
        %v914 = vld [vmem:[%s4 + $0x398] sm:$0xff]
        %v915 = vld [vmem:[%s4 + $0x3a0] sm:$0xff]
        %v916 = vld [vmem:[%s4 + $0x3a8] sm:$0xff]
        %v917 = vld [vmem:[%s4 + $0x3b0] sm:$0xff]
        %v918 = vld [vmem:[%s4 + $0x3b8] sm:$0xff]
        %v919 = vld [vmem:[%s4 + $0x3c0] sm:$0xff]
        %v920 = vld [vmem:[%s4 + $0x3c8] sm:$0xff]
        %v921 = vld [vmem:[%s4 + $0x3d0] sm:$0xff]
        %v922 = vld [vmem:[%s4 + $0x3d8] sm:$0xff]
        %v923 = vld [vmem:[%s4 + $0x3e0] sm:$0xff]
        %v924 = vld [vmem:[%s4 + $0x3e8] sm:$0xff]
        %v925 = vld [vmem:[%s4 + $0x3f0] sm:$0xff]
        %v926 = vld [vmem:[%s4 + $0x3f8] sm:$0xff]
        %v927 = vld [vmem:[%s4 + $0x400] sm:$0xff]
        %v928 = vld [vmem:[%s4 + $0x408] sm:$0xff]
        %v929 = vld [vmem:[%s4 + $0x410] sm:$0xff]
        %v930 = vld [vmem:[%s4 + $0x418] sm:$0xff]
        %v931 = vld [vmem:[%s4 + $0x420] sm:$0xff]
        %v932 = vld [vmem:[%s4 + $0x428] sm:$0xff]
        %v933 = vld [vmem:[%s4 + $0x430] sm:$0xff]
        %v934 = vld [vmem:[%s4 + $0x438] sm:$0xff]
        %v935 = vld [vmem:[%s4 + $0x440] sm:$0xff]
        %v936 = vld [vmem:[%s4 + $0x448] sm:$0xff]
        %v937 = vld [vmem:[%s4 + $0x450] sm:$0xff]
        %v938 = vld [vmem:[%s4 + $0x458] sm:$0xff]
        %v939 = vld [vmem:[%s4 + $0x460] sm:$0xff]
        %v940 = vld [vmem:[%s4 + $0x468] sm:$0xff]
        %v941 = vld [vmem:[%s4 + $0x470] sm:$0xff]
        %v942 = vld [vmem:[%s4 + $0x478] sm:$0xff]
        %v943 = vld [vmem:[%s4 + $0x480] sm:$0xff]
        %v944 = vld [vmem:[%s4 + $0x488] sm:$0xff]
        %v945 = vld [vmem:[%s4 + $0x490] sm:$0xff]
        %v946 = vld [vmem:[%s4 + $0x498] sm:$0xff]
        %v947 = vld [vmem:[%s4 + $0x4a0] sm:$0xff]
        %v948 = vld [vmem:[%s4 + $0x4a8] sm:$0xff]
        %v949 = vld [vmem:[%s4 + $0x4b0] sm:$0xff]
        %v950 = vld [vmem:[%s4 + $0x4b8] sm:$0xff]
        %v951 = vld [vmem:[%s4 + $0x4c0] sm:$0xff]
        %v952 = vld [vmem:[%s4 + $0x4c8] sm:$0xff]
        %v953 = vld [vmem:[%s4 + $0x4d0] sm:$0xff]
        %v954 = vld [vmem:[%s4 + $0x4d8] sm:$0xff]
        %v955 = vld [vmem:[%s4 + $0x4e0] sm:$0xff]
        %v956 = vld [vmem:[%s4 + $0x4e8] sm:$0xff]
        %v957 = vld [vmem:[%s4 + $0x4f0] sm:$0xff]
        %v958 = vld [vmem:[%s4 + $0x4f8] sm:$0xff]
        %v959 = vld [vmem:[%s4 + $0x500] sm:$0xff]
        %v960 = vld [vmem:[%s4 + $0x508] sm:$0xff]
        %v961 = vld [vmem:[%s4 + $0x510] sm:$0xff]
        %v962 = vld [vmem:[%s4 + $0x518] sm:$0xff]
        %v963 = vld [vmem:[%s4 + $0x520] sm:$0xff]
        %v964 = vld [vmem:[%s4 + $0x528] sm:$0xff]
        %v965 = vld [vmem:[%s4 + $0x530] sm:$0xff]
        %v966 = vld [vmem:[%s4 + $0x538] sm:$0xff]
        %v967 = vld [vmem:[%s4 + $0x540] sm:$0xff]
        %v968 = vld [vmem:[%s4 + $0x548] sm:$0xff]
        %v969 = vld [vmem:[%s4 + $0x550] sm:$0xff]
        %v970 = vld [vmem:[%s4 + $0x558] sm:$0xff]
        %v971 = vld [vmem:[%s4 + $0x560] sm:$0xff]
        %v972 = vld [vmem:[%s4 + $0x568] sm:$0xff]
        %v973 = vld [vmem:[%s4 + $0x570] sm:$0xff]
        %v974 = vld [vmem:[%s4 + $0x578] sm:$0xff]
        %v975 = vld [vmem:[%s4 + $0x580] sm:$0xff]
        %v976 = vld [vmem:[%s4 + $0x588] sm:$0xff]
        %v977 = vld [vmem:[%s4 + $0x590] sm:$0xff]
        %v978 = vld [vmem:[%s4 + $0x598] sm:$0xff]
        %v979 = vld [vmem:[%s4 + $0x5a0] sm:$0xff]
        %v980 = vld [vmem:[%s4 + $0x5a8] sm:$0xff]
        %v981 = vld [vmem:[%s4 + $0x5b0] sm:$0xff]
        %v982 = vld [vmem:[%s4 + $0x5b8] sm:$0xff]
        %v983 = vld [vmem:[%s4 + $0x5c0] sm:$0xff]
        %v984 = vld [vmem:[%s4 + $0x5c8] sm:$0xff]
        %v985 = vld [vmem:[%s4 + $0x5d0] sm:$0xff]
        %v986 = vld [vmem:[%s4 + $0x5d8] sm:$0xff]
        %v987 = vld [vmem:[%s4 + $0x5e0] sm:$0xff]
        %v988 = vld [vmem:[%s4 + $0x5e8] sm:$0xff]
        %v989 = vld [vmem:[%s4 + $0x5f0] sm:$0xff]
        %v990 = vld [vmem:[%s4 + $0x5f8] sm:$0xff]
        %v991 = vld [vmem:[%s4 + $0x600] sm:$0xff]
        %v992 = vld [vmem:[%s4 + $0x608] sm:$0xff]
        %v993 = vld [vmem:[%s4 + $0x610] sm:$0xff]
        %v994 = vld [vmem:[%s4 + $0x618] sm:$0xff]
        %v995 = vld [vmem:[%s4 + $0x620] sm:$0xff]
        %v996 = vld [vmem:[%s4 + $0x628] sm:$0xff]
        %v997 = vld [vmem:[%s4 + $0x630] sm:$0xff]
        %v998 = vld [vmem:[%s4 + $0x638] sm:$0xff]
        %v999 = vld [vmem:[%s4 + $0x640] sm:$0xff]
        %v1000 = vld [vmem:[%s4 + $0x648] sm:$0xff]
        %v1001 = vld [vmem:[%s4 + $0x650] sm:$0xff]
        %v1002 = vld [vmem:[%s4 + $0x658] sm:$0xff]
        %v1003 = vld [vmem:[%s4 + $0x660] sm:$0xff]
        %v1004 = vld [vmem:[%s4 + $0x668] sm:$0xff]
        %v1005 = vld [vmem:[%s4 + $0x670] sm:$0xff]
        %v1006 = vld [vmem:[%s4 + $0x678] sm:$0xff]
        %v1007 = vld [vmem:[%s4 + $0x680] sm:$0xff]
        %v1008 = vld [vmem:[%s4 + $0x688] sm:$0xff]
        %v1009 = vld [vmem:[%s4 + $0x690] sm:$0xff]
        %v1010 = vld [vmem:[%s4 + $0x698] sm:$0xff]
        %v1011 = vld [vmem:[%s4 + $0x6a0] sm:$0xff]
        %v1012 = vld [vmem:[%s4 + $0x6a8] sm:$0xff]
        %v1013 = vld [vmem:[%s4 + $0x6b0] sm:$0xff]
        %v1014 = vld [vmem:[%s4 + $0x6b8] sm:$0xff]
        %v1015 = vld [vmem:[%s4 + $0x6c0] sm:$0xff]
        %v1016 = vld [vmem:[%s4 + $0x6c8] sm:$0xff]
        %v1017 = vld [vmem:[%s4 + $0x6d0] sm:$0xff]
        %v1018 = vld [vmem:[%s4 + $0x6d8] sm:$0xff]
        %v1019 = vld [vmem:[%s4 + $0x6e0] sm:$0xff]
        %v1020 = vld [vmem:[%s4 + $0x6e8] sm:$0xff]
        %v1021 = vld [vmem:[%s4 + $0x6f0] sm:$0xff]
        %v1022 = vld [vmem:[%s4 + $0x6f8] sm:$0xff]
        %v1023 = vld [vmem:[%s4 + $0x700] sm:$0xff]
        %v1024 = vld [vmem:[%s4 + $0x708] sm:$0xff]
        %v1025 = vld [vmem:[%s4 + $0x710] sm:$0xff]
        %v1026 = vld [vmem:[%s4 + $0x718] sm:$0xff]
        %v1027 = vld [vmem:[%s4 + $0x720] sm:$0xff]
        %v1028 = vld [vmem:[%s4 + $0x728] sm:$0xff]
        %v1029 = vld [vmem:[%s4 + $0x730] sm:$0xff]
        %v1030 = vld [vmem:[%s4 + $0x738] sm:$0xff]
        %v1031 = vld [vmem:[%s4 + $0x740] sm:$0xff]
        %v1032 = vld [vmem:[%s4 + $0x748] sm:$0xff]
        %v1033 = vld [vmem:[%s4 + $0x750] sm:$0xff]
        %v1034 = vld [vmem:[%s4 + $0x758] sm:$0xff]
        %v1035 = vld [vmem:[%s4 + $0x760] sm:$0xff]
        %v1036 = vld [vmem:[%s4 + $0x768] sm:$0xff]
        %v1037 = vld [vmem:[%s4 + $0x770] sm:$0xff]
        %v1038 = vld [vmem:[%s4 + $0x778] sm:$0xff]
        %v1039 = vld [vmem:[%s4 + $0x780] sm:$0xff]
        %v1040 = vld [vmem:[%s4 + $0x788] sm:$0xff]
        %v1041 = vld [vmem:[%s4 + $0x790] sm:$0xff]
        %v1042 = vld [vmem:[%s4 + $0x798] sm:$0xff]
        %v1043 = vld [vmem:[%s4 + $0x7a0] sm:$0xff]
        %v1044 = vld [vmem:[%s4 + $0x7a8] sm:$0xff]
        %v1045 = vld [vmem:[%s4 + $0x7b0] sm:$0xff]
        %v1046 = vld [vmem:[%s4 + $0x7b8] sm:$0xff]
        %v1047 = vld [vmem:[%s4 + $0x7c0] sm:$0xff]
        %v1048 = vld [vmem:[%s4 + $0x7c8] sm:$0xff]
        %v1049 = vld [vmem:[%s4 + $0x7d0] sm:$0xff]
        %v1050 = vld [vmem:[%s4 + $0x7d8] sm:$0xff]
        %v1051 = vld [vmem:[%s4 + $0x7e0] sm:$0xff]
        %v1052 = vld [vmem:[%s4 + $0x7e8] sm:$0xff]
        %v1053 = vld [vmem:[%s4 + $0x7f0] sm:$0xff]
        %v1054 = vld [vmem:[%s4 + $0x7f8] sm:$0xff]
        %v1055 = vld [vmem:[%s5] sm:$0x1]
        %v1058 = vlaneseq
        %v1059 = vshrl.u32 %v1058, 7
        %v1060 = vsub.s32 0, %v1059
        %v1061 = vrot.slane %v797, %v1060
        %v1062 = vlaneseq
        %v1063 = vshrl.u32 %v1062, 7
        %v1064 = vsub.s32 1, %v1063
        %v1065 = vrot.slane %v797, %v1064
        %v1066 = vlaneseq
        %v1067 = vshrl.u32 %v1066, 7
        %v1068 = vsub.s32 2, %v1067
        %v1069 = vrot.slane %v797, %v1068
        %v1070 = vlaneseq
        %v1071 = vshrl.u32 %v1070, 7
        %v1072 = vsub.s32 3, %v1071
        %v1073 = vrot.slane %v797, %v1072
        %v1074 = vlaneseq
        %v1075 = vshrl.u32 %v1074, 7
        %v1076 = vsub.s32 4, %v1075
        %v1077 = vrot.slane %v797, %v1076
        %v1078 = vlaneseq
        %v1079 = vshrl.u32 %v1078, 7
        %v1080 = vsub.s32 5, %v1079
        %v1081 = vrot.slane %v797, %v1080
        %v1082 = vlaneseq
        %v1083 = vshrl.u32 %v1082, 7
        %v1084 = vsub.s32 6, %v1083
        %v1085 = vrot.slane %v797, %v1084
        %v1086 = vlaneseq
        %v1087 = vshrl.u32 %v1086, 7
        %v1088 = vsub.s32 7, %v1087
        %v1089 = vrot.slane %v797, %v1088
        %v1090 = vlaneseq
        %v1091 = vshrl.u32 %v1090, 7
        %v1092 = vsub.s32 0, %v1091
        %v1093 = vrot.slane %v798, %v1092
        %v1094 = vlaneseq
        %v1095 = vshrl.u32 %v1094, 7
        %v1096 = vsub.s32 1, %v1095
        %v1097 = vrot.slane %v798, %v1096
        %v1098 = vlaneseq
        %v1099 = vshrl.u32 %v1098, 7
        %v1100 = vsub.s32 2, %v1099
        %v1101 = vrot.slane %v798, %v1100
        %v1102 = vlaneseq
        %v1103 = vshrl.u32 %v1102, 7
        %v1104 = vsub.s32 3, %v1103
        %v1105 = vrot.slane %v798, %v1104
        %v1106 = vlaneseq
        %v1107 = vshrl.u32 %v1106, 7
        %v1108 = vsub.s32 4, %v1107
        %v1109 = vrot.slane %v798, %v1108
        %v1110 = vlaneseq
        %v1111 = vshrl.u32 %v1110, 7
        %v1112 = vsub.s32 5, %v1111
        %v1113 = vrot.slane %v798, %v1112
        %v1114 = vlaneseq
        %v1115 = vshrl.u32 %v1114, 7
        %v1116 = vsub.s32 6, %v1115
        %v1117 = vrot.slane %v798, %v1116
        %v1118 = vlaneseq
        %v1119 = vshrl.u32 %v1118, 7
        %v1120 = vsub.s32 7, %v1119
        %v1121 = vrot.slane %v798, %v1120
        %1138 = vmatprep.subr.mxu0 0.0
        %1139 = vmatpush1.msra.mxu0 %v814
        %1140 = vmatprep.subr.mxu0 0.0
        %1141 = vmatpush1.msra.mxu0 %v813
        %1142 = vmatprep.subr.mxu0 0.0
        %1143 = vmatpush1.msra.mxu0 %v812
        %1144 = vmatprep.subr.mxu0 0.0
        %1145 = vmatpush1.msra.mxu0 %v811
        %1146 = vmatprep.subr.mxu0 0.0
        %1147 = vmatpush1.msra.mxu0 %v810
        %1148 = vmatprep.subr.mxu0 0.0
        %1149 = vmatpush1.msra.mxu0 %v809
        %1150 = vmatprep.subr.mxu0 0.0
        %1151 = vmatpush1.msra.mxu0 %v808
        %1152 = vmatprep.subr.mxu0 0.0
        %1153 = vmatpush1.msra.mxu0 %v807
        %1154 = vmatprep.subr.mxu0 0.0
        %1155 = vmatpush1.msra.mxu0 %v806
        %1156 = vmatprep.subr.mxu0 0.0
        %1157 = vmatpush1.msra.mxu0 %v805
        %1158 = vmatprep.subr.mxu0 0.0
        %1159 = vmatpush1.msra.mxu0 %v804
        %1160 = vmatprep.subr.mxu0 0.0
        %1161 = vmatpush1.msra.mxu0 %v803
        %1162 = vmatprep.subr.mxu0 0.0
        %1163 = vmatpush1.msra.mxu0 %v802
        %1164 = vmatprep.subr.mxu0 0.0
        %1165 = vmatpush1.msra.mxu0 %v801
        %1166 = vmatprep.subr.mxu0 0.0
        %1167 = vmatpush1.msra.mxu0 %v800
        %1168 = vmatprep.subr.mxu0 0.0
        %1169 = vmatpush1.msra.mxu0 %v799
        %1170 = vmatprep.subr.mxu0 0.0
        %1171 = vmatpush2.msra.mxu0 %v830
        %1172 = vmatprep.subr.mxu0 0.0
        %1173 = vmatpush2.msra.mxu0 %v829
        %1174 = vmatprep.subr.mxu0 0.0
        %1175 = vmatpush2.msra.mxu0 %v828
        %1176 = vmatprep.subr.mxu0 0.0
        %1177 = vmatpush2.msra.mxu0 %v827
        %1178 = vmatprep.subr.mxu0 0.0
        %1179 = vmatpush2.msra.mxu0 %v826
        %1180 = vmatprep.subr.mxu0 0.0
        %1181 = vmatpush2.msra.mxu0 %v825
        %1182 = vmatprep.subr.mxu0 0.0
        %1183 = vmatpush2.msra.mxu0 %v824
        %1184 = vmatprep.subr.mxu0 0.0
        %1185 = vmatpush2.msra.mxu0 %v823
        %1186 = vmatprep.subr.mxu0 0.0
        %1187 = vmatpush2.msra.mxu0 %v822
        %1188 = vmatprep.subr.mxu0 0.0
        %1189 = vmatpush2.msra.mxu0 %v821
        %1190 = vmatprep.subr.mxu0 0.0
        %1191 = vmatpush2.msra.mxu0 %v820
        %1192 = vmatprep.subr.mxu0 0.0
        %1193 = vmatpush2.msra.mxu0 %v819
        %1194 = vmatprep.subr.mxu0 0.0
        %1195 = vmatpush2.msra.mxu0 %v818
        %1196 = vmatprep.subr.mxu0 0.0
        %1197 = vmatpush2.msra.mxu0 %v817
        %1198 = vmatprep.subr.mxu0 0.0
        %1199 = vmatpush2.msra.mxu0 %v816
        %1200 = vmatprep.subr.mxu0 0.0
        %1201 = vmatpush2.msra.mxu0 %v815
        %1202 = vmatprep.mubr.f32.mxu0 %v1065
        %1203 = vmatmul.mubr.f32.gmra.mxu0 %v1061
        %v1204 = vpop.f32.mrf.mxu0
        %v1205 = vadd.f32 %v1055, %v1204
        %v1206 = vpop.f32.mrf.mxu0
        %1207 = vdwg.mxu0
        %1208 = vmatprep.subr.mxu0 0.0
        %1209 = vmatpush1.msra.mxu0 %v846
        %1210 = vmatprep.subr.mxu0 0.0
        %1211 = vmatpush1.msra.mxu0 %v845
        %1212 = vmatprep.subr.mxu0 0.0
        %1213 = vmatpush1.msra.mxu0 %v844
        %1214 = vmatprep.subr.mxu0 0.0
        %1215 = vmatpush1.msra.mxu0 %v843
        %1216 = vmatprep.subr.mxu0 0.0
        %1217 = vmatpush1.msra.mxu0 %v842
        %1218 = vmatprep.subr.mxu0 0.0
        %1219 = vmatpush1.msra.mxu0 %v841
        %1220 = vmatprep.subr.mxu0 0.0
        %1221 = vmatpush1.msra.mxu0 %v840
        %1222 = vmatprep.subr.mxu0 0.0
        %1223 = vmatpush1.msra.mxu0 %v839
        %1224 = vmatprep.subr.mxu0 0.0
        %1225 = vmatpush1.msra.mxu0 %v838
        %1226 = vmatprep.subr.mxu0 0.0
        %1227 = vmatpush1.msra.mxu0 %v837
        %1228 = vmatprep.subr.mxu0 0.0
        %1229 = vmatpush1.msra.mxu0 %v836
        %1230 = vmatprep.subr.mxu0 0.0
        %1231 = vmatpush1.msra.mxu0 %v835
        %1232 = vmatprep.subr.mxu0 0.0
        %1233 = vmatpush1.msra.mxu0 %v834
        %1234 = vmatprep.subr.mxu0 0.0
        %1235 = vmatpush1.msra.mxu0 %v833
        %1236 = vmatprep.subr.mxu0 0.0
        %1237 = vmatpush1.msra.mxu0 %v832
        %1238 = vmatprep.subr.mxu0 0.0
        %1239 = vmatpush1.msra.mxu0 %v831
        %1240 = vmatprep.subr.mxu0 0.0
        %1241 = vmatpush2.msra.mxu0 %v862
        %1242 = vmatprep.subr.mxu0 0.0
        %1243 = vmatpush2.msra.mxu0 %v861
        %1244 = vmatprep.subr.mxu0 0.0
        %1245 = vmatpush2.msra.mxu0 %v860
        %1246 = vmatprep.subr.mxu0 0.0
        %1247 = vmatpush2.msra.mxu0 %v859
        %1248 = vmatprep.subr.mxu0 0.0
        %1249 = vmatpush2.msra.mxu0 %v858
        %1250 = vmatprep.subr.mxu0 0.0
        %1251 = vmatpush2.msra.mxu0 %v857
        %1252 = vmatprep.subr.mxu0 0.0
        %1253 = vmatpush2.msra.mxu0 %v856
        %1254 = vmatprep.subr.mxu0 0.0
        %1255 = vmatpush2.msra.mxu0 %v855
        %1256 = vmatprep.subr.mxu0 0.0
        %1257 = vmatpush2.msra.mxu0 %v854
        %1258 = vmatprep.subr.mxu0 0.0
        %1259 = vmatpush2.msra.mxu0 %v853
        %1260 = vmatprep.subr.mxu0 0.0
        %1261 = vmatpush2.msra.mxu0 %v852
        %1262 = vmatprep.subr.mxu0 0.0
        %1263 = vmatpush2.msra.mxu0 %v851
        %1264 = vmatprep.subr.mxu0 0.0
        %1265 = vmatpush2.msra.mxu0 %v850
        %1266 = vmatprep.subr.mxu0 0.0
        %1267 = vmatpush2.msra.mxu0 %v849
        %1268 = vmatprep.subr.mxu0 0.0
        %1269 = vmatpush2.msra.mxu0 %v848
        %1270 = vmatprep.subr.mxu0 0.0
        %1271 = vmatpush2.msra.mxu0 %v847
        %1272 = vmatprep.mubr.f32.mxu0 %v1073
        %1273 = vmatmul.mubr.f32.gmra.mxu0 %v1069
        %v1274 = vpop.f32.mrf.mxu0
        %v1275 = vadd.f32 %v1205, %v1274
        %v1276 = vpop.f32.mrf.mxu0
        %1277 = vdwg.mxu0
        %1278 = vmatprep.subr.mxu0 0.0
        %1279 = vmatpush1.msra.mxu0 %v878
        %1280 = vmatprep.subr.mxu0 0.0
        %1281 = vmatpush1.msra.mxu0 %v877
        %1282 = vmatprep.subr.mxu0 0.0
        %1283 = vmatpush1.msra.mxu0 %v876
        %1284 = vmatprep.subr.mxu0 0.0
        %1285 = vmatpush1.msra.mxu0 %v875
        %1286 = vmatprep.subr.mxu0 0.0
        %1287 = vmatpush1.msra.mxu0 %v874
        %1288 = vmatprep.subr.mxu0 0.0
        %1289 = vmatpush1.msra.mxu0 %v873
        %1290 = vmatprep.subr.mxu0 0.0
        %1291 = vmatpush1.msra.mxu0 %v872
        %1292 = vmatprep.subr.mxu0 0.0
        %1293 = vmatpush1.msra.mxu0 %v871
        %1294 = vmatprep.subr.mxu0 0.0
        %1295 = vmatpush1.msra.mxu0 %v870
        %1296 = vmatprep.subr.mxu0 0.0
        %1297 = vmatpush1.msra.mxu0 %v869
        %1298 = vmatprep.subr.mxu0 0.0
        %1299 = vmatpush1.msra.mxu0 %v868
        %1300 = vmatprep.subr.mxu0 0.0
        %1301 = vmatpush1.msra.mxu0 %v867
        %1302 = vmatprep.subr.mxu0 0.0
        %1303 = vmatpush1.msra.mxu0 %v866
        %1304 = vmatprep.subr.mxu0 0.0
        %1305 = vmatpush1.msra.mxu0 %v865
        %1306 = vmatprep.subr.mxu0 0.0
        %1307 = vmatpush1.msra.mxu0 %v864
        %1308 = vmatprep.subr.mxu0 0.0
        %1309 = vmatpush1.msra.mxu0 %v863
        %1310 = vmatprep.subr.mxu0 0.0
        %1311 = vmatpush2.msra.mxu0 %v894
        %1312 = vmatprep.subr.mxu0 0.0
        %1313 = vmatpush2.msra.mxu0 %v893
        %1314 = vmatprep.subr.mxu0 0.0
        %1315 = vmatpush2.msra.mxu0 %v892
        %1316 = vmatprep.subr.mxu0 0.0
        %1317 = vmatpush2.msra.mxu0 %v891
        %1318 = vmatprep.subr.mxu0 0.0
        %1319 = vmatpush2.msra.mxu0 %v890
        %1320 = vmatprep.subr.mxu0 0.0
        %1321 = vmatpush2.msra.mxu0 %v889
        %1322 = vmatprep.subr.mxu0 0.0
        %1323 = vmatpush2.msra.mxu0 %v888
        %1324 = vmatprep.subr.mxu0 0.0
        %1325 = vmatpush2.msra.mxu0 %v887
        %1326 = vmatprep.subr.mxu0 0.0
        %1327 = vmatpush2.msra.mxu0 %v886
        %1328 = vmatprep.subr.mxu0 0.0
        %1329 = vmatpush2.msra.mxu0 %v885
        %1330 = vmatprep.subr.mxu0 0.0
        %1331 = vmatpush2.msra.mxu0 %v884
        %1332 = vmatprep.subr.mxu0 0.0
        %1333 = vmatpush2.msra.mxu0 %v883
        %1334 = vmatprep.subr.mxu0 0.0
        %1335 = vmatpush2.msra.mxu0 %v882
        %1336 = vmatprep.subr.mxu0 0.0
        %1337 = vmatpush2.msra.mxu0 %v881
        %1338 = vmatprep.subr.mxu0 0.0
        %1339 = vmatpush2.msra.mxu0 %v880
        %1340 = vmatprep.subr.mxu0 0.0
        %1341 = vmatpush2.msra.mxu0 %v879
        %1342 = vmatprep.mubr.f32.mxu0 %v1081
        %1343 = vmatmul.mubr.f32.gmra.mxu0 %v1077
        %v1344 = vpop.f32.mrf.mxu0
        %v1345 = vadd.f32 %v1275, %v1344
        %v1346 = vpop.f32.mrf.mxu0
        %1347 = vdwg.mxu0
        %1348 = vmatprep.subr.mxu0 0.0
        %1349 = vmatpush1.msra.mxu0 %v910
        %1350 = vmatprep.subr.mxu0 0.0
        %1351 = vmatpush1.msra.mxu0 %v909
        %1352 = vmatprep.subr.mxu0 0.0
        %1353 = vmatpush1.msra.mxu0 %v908
        %1354 = vmatprep.subr.mxu0 0.0
        %1355 = vmatpush1.msra.mxu0 %v907
        %1356 = vmatprep.subr.mxu0 0.0
        %1357 = vmatpush1.msra.mxu0 %v906
        %1358 = vmatprep.subr.mxu0 0.0
        %1359 = vmatpush1.msra.mxu0 %v905
        %1360 = vmatprep.subr.mxu0 0.0
        %1361 = vmatpush1.msra.mxu0 %v904
        %1362 = vmatprep.subr.mxu0 0.0
        %1363 = vmatpush1.msra.mxu0 %v903
        %1364 = vmatprep.subr.mxu0 0.0
        %1365 = vmatpush1.msra.mxu0 %v902
        %1366 = vmatprep.subr.mxu0 0.0
        %1367 = vmatpush1.msra.mxu0 %v901
        %1368 = vmatprep.subr.mxu0 0.0
        %1369 = vmatpush1.msra.mxu0 %v900
        %1370 = vmatprep.subr.mxu0 0.0
        %1371 = vmatpush1.msra.mxu0 %v899
        %1372 = vmatprep.subr.mxu0 0.0
        %1373 = vmatpush1.msra.mxu0 %v898
        %1374 = vmatprep.subr.mxu0 0.0
        %1375 = vmatpush1.msra.mxu0 %v897
        %1376 = vmatprep.subr.mxu0 0.0
        %1377 = vmatpush1.msra.mxu0 %v896
        %1378 = vmatprep.subr.mxu0 0.0
        %1379 = vmatpush1.msra.mxu0 %v895
        %1380 = vmatprep.subr.mxu0 0.0
        %1381 = vmatpush2.msra.mxu0 %v926
        %1382 = vmatprep.subr.mxu0 0.0
        %1383 = vmatpush2.msra.mxu0 %v925
        %1384 = vmatprep.subr.mxu0 0.0
        %1385 = vmatpush2.msra.mxu0 %v924
        %1386 = vmatprep.subr.mxu0 0.0
        %1387 = vmatpush2.msra.mxu0 %v923
        %1388 = vmatprep.subr.mxu0 0.0
        %1389 = vmatpush2.msra.mxu0 %v922
        %1390 = vmatprep.subr.mxu0 0.0
        %1391 = vmatpush2.msra.mxu0 %v921
        %1392 = vmatprep.subr.mxu0 0.0
        %1393 = vmatpush2.msra.mxu0 %v920
        %1394 = vmatprep.subr.mxu0 0.0
        %1395 = vmatpush2.msra.mxu0 %v919
        %1396 = vmatprep.subr.mxu0 0.0
        %1397 = vmatpush2.msra.mxu0 %v918
        %1398 = vmatprep.subr.mxu0 0.0
        %1399 = vmatpush2.msra.mxu0 %v917
        %1400 = vmatprep.subr.mxu0 0.0
        %1401 = vmatpush2.msra.mxu0 %v916
        %1402 = vmatprep.subr.mxu0 0.0
        %1403 = vmatpush2.msra.mxu0 %v915
        %1404 = vmatprep.subr.mxu0 0.0
        %1405 = vmatpush2.msra.mxu0 %v914
        %1406 = vmatprep.subr.mxu0 0.0
        %1407 = vmatpush2.msra.mxu0 %v913
        %1408 = vmatprep.subr.mxu0 0.0
        %1409 = vmatpush2.msra.mxu0 %v912
        %1410 = vmatprep.subr.mxu0 0.0
        %1411 = vmatpush2.msra.mxu0 %v911
        %1412 = vmatprep.mubr.f32.mxu0 %v1089
        %1413 = vmatmul.mubr.f32.gmra.mxu0 %v1085
        %v1414 = vpop.f32.mrf.mxu0
        %v1415 = vadd.f32 %v1345, %v1414
        %v1416 = vpop.f32.mrf.mxu0
        %1417 = vdwg.mxu0
        %1418 = vmatprep.subr.mxu0 0.0
        %1419 = vmatpush1.msra.mxu0 %v942
        %1420 = vmatprep.subr.mxu0 0.0
        %1421 = vmatpush1.msra.mxu0 %v941
        %1422 = vmatprep.subr.mxu0 0.0
        %1423 = vmatpush1.msra.mxu0 %v940
        %1424 = vmatprep.subr.mxu0 0.0
        %1425 = vmatpush1.msra.mxu0 %v939
        %1426 = vmatprep.subr.mxu0 0.0
        %1427 = vmatpush1.msra.mxu0 %v938
        %1428 = vmatprep.subr.mxu0 0.0
        %1429 = vmatpush1.msra.mxu0 %v937
        %1430 = vmatprep.subr.mxu0 0.0
        %1431 = vmatpush1.msra.mxu0 %v936
        %1432 = vmatprep.subr.mxu0 0.0
        %1433 = vmatpush1.msra.mxu0 %v935
        %1434 = vmatprep.subr.mxu0 0.0
        %1435 = vmatpush1.msra.mxu0 %v934
        %1436 = vmatprep.subr.mxu0 0.0
        %1437 = vmatpush1.msra.mxu0 %v933
        %1438 = vmatprep.subr.mxu0 0.0
        %1439 = vmatpush1.msra.mxu0 %v932
        %1440 = vmatprep.subr.mxu0 0.0
        %1441 = vmatpush1.msra.mxu0 %v931
        %1442 = vmatprep.subr.mxu0 0.0
        %1443 = vmatpush1.msra.mxu0 %v930
        %1444 = vmatprep.subr.mxu0 0.0
        %1445 = vmatpush1.msra.mxu0 %v929
        %1446 = vmatprep.subr.mxu0 0.0
        %1447 = vmatpush1.msra.mxu0 %v928
        %1448 = vmatprep.subr.mxu0 0.0
        %1449 = vmatpush1.msra.mxu0 %v927
        %1450 = vmatprep.subr.mxu0 0.0
        %1451 = vmatpush2.msra.mxu0 %v958
        %1452 = vmatprep.subr.mxu0 0.0
        %1453 = vmatpush2.msra.mxu0 %v957
        %1454 = vmatprep.subr.mxu0 0.0
        %1455 = vmatpush2.msra.mxu0 %v956
        %1456 = vmatprep.subr.mxu0 0.0
        %1457 = vmatpush2.msra.mxu0 %v955
        %1458 = vmatprep.subr.mxu0 0.0
        %1459 = vmatpush2.msra.mxu0 %v954
        %1460 = vmatprep.subr.mxu0 0.0
        %1461 = vmatpush2.msra.mxu0 %v953
        %1462 = vmatprep.subr.mxu0 0.0
        %1463 = vmatpush2.msra.mxu0 %v952
        %1464 = vmatprep.subr.mxu0 0.0
        %1465 = vmatpush2.msra.mxu0 %v951
        %1466 = vmatprep.subr.mxu0 0.0
        %1467 = vmatpush2.msra.mxu0 %v950
        %1468 = vmatprep.subr.mxu0 0.0
        %1469 = vmatpush2.msra.mxu0 %v949
        %1470 = vmatprep.subr.mxu0 0.0
        %1471 = vmatpush2.msra.mxu0 %v948
        %1472 = vmatprep.subr.mxu0 0.0
        %1473 = vmatpush2.msra.mxu0 %v947
        %1474 = vmatprep.subr.mxu0 0.0
        %1475 = vmatpush2.msra.mxu0 %v946
        %1476 = vmatprep.subr.mxu0 0.0
        %1477 = vmatpush2.msra.mxu0 %v945
        %1478 = vmatprep.subr.mxu0 0.0
        %1479 = vmatpush2.msra.mxu0 %v944
        %1480 = vmatprep.subr.mxu0 0.0
        %1481 = vmatpush2.msra.mxu0 %v943
        %1482 = vmatprep.mubr.f32.mxu0 %v1097
        %1483 = vmatmul.mubr.f32.gmra.mxu0 %v1093
        %v1484 = vpop.f32.mrf.mxu0
        %v1485 = vadd.f32 %v1415, %v1484
        %v1486 = vpop.f32.mrf.mxu0
        %1487 = vdwg.mxu0
        %1488 = vmatprep.subr.mxu0 0.0
        %1489 = vmatpush1.msra.mxu0 %v974
        %1490 = vmatprep.subr.mxu0 0.0
        %1491 = vmatpush1.msra.mxu0 %v973
        %1492 = vmatprep.subr.mxu0 0.0
        %1493 = vmatpush1.msra.mxu0 %v972
        %1494 = vmatprep.subr.mxu0 0.0
        %1495 = vmatpush1.msra.mxu0 %v971
        %1496 = vmatprep.subr.mxu0 0.0
        %1497 = vmatpush1.msra.mxu0 %v970
        %1498 = vmatprep.subr.mxu0 0.0
        %1499 = vmatpush1.msra.mxu0 %v969
        %1500 = vmatprep.subr.mxu0 0.0
        %1501 = vmatpush1.msra.mxu0 %v968
        %1502 = vmatprep.subr.mxu0 0.0
        %1503 = vmatpush1.msra.mxu0 %v967
        %1504 = vmatprep.subr.mxu0 0.0
        %1505 = vmatpush1.msra.mxu0 %v966
        %1506 = vmatprep.subr.mxu0 0.0
        %1507 = vmatpush1.msra.mxu0 %v965
        %1508 = vmatprep.subr.mxu0 0.0
        %1509 = vmatpush1.msra.mxu0 %v964
        %1510 = vmatprep.subr.mxu0 0.0
        %1511 = vmatpush1.msra.mxu0 %v963
        %1512 = vmatprep.subr.mxu0 0.0
        %1513 = vmatpush1.msra.mxu0 %v962
        %1514 = vmatprep.subr.mxu0 0.0
        %1515 = vmatpush1.msra.mxu0 %v961
        %1516 = vmatprep.subr.mxu0 0.0
        %1517 = vmatpush1.msra.mxu0 %v960
        %1518 = vmatprep.subr.mxu0 0.0
        %1519 = vmatpush1.msra.mxu0 %v959
        %1520 = vmatprep.subr.mxu0 0.0
        %1521 = vmatpush2.msra.mxu0 %v990
        %1522 = vmatprep.subr.mxu0 0.0
        %1523 = vmatpush2.msra.mxu0 %v989
        %1524 = vmatprep.subr.mxu0 0.0
        %1525 = vmatpush2.msra.mxu0 %v988
        %1526 = vmatprep.subr.mxu0 0.0
        %1527 = vmatpush2.msra.mxu0 %v987
        %1528 = vmatprep.subr.mxu0 0.0
        %1529 = vmatpush2.msra.mxu0 %v986
        %1530 = vmatprep.subr.mxu0 0.0
        %1531 = vmatpush2.msra.mxu0 %v985
        %1532 = vmatprep.subr.mxu0 0.0
        %1533 = vmatpush2.msra.mxu0 %v984
        %1534 = vmatprep.subr.mxu0 0.0
        %1535 = vmatpush2.msra.mxu0 %v983
        %1536 = vmatprep.subr.mxu0 0.0
        %1537 = vmatpush2.msra.mxu0 %v982
        %1538 = vmatprep.subr.mxu0 0.0
        %1539 = vmatpush2.msra.mxu0 %v981
        %1540 = vmatprep.subr.mxu0 0.0
        %1541 = vmatpush2.msra.mxu0 %v980
        %1542 = vmatprep.subr.mxu0 0.0
        %1543 = vmatpush2.msra.mxu0 %v979
        %1544 = vmatprep.subr.mxu0 0.0
        %1545 = vmatpush2.msra.mxu0 %v978
        %1546 = vmatprep.subr.mxu0 0.0
        %1547 = vmatpush2.msra.mxu0 %v977
        %1548 = vmatprep.subr.mxu0 0.0
        %1549 = vmatpush2.msra.mxu0 %v976
        %1550 = vmatprep.subr.mxu0 0.0
        %1551 = vmatpush2.msra.mxu0 %v975
        %1552 = vmatprep.mubr.f32.mxu0 %v1105
        %1553 = vmatmul.mubr.f32.gmra.mxu0 %v1101
        %v1554 = vpop.f32.mrf.mxu0
        %v1555 = vadd.f32 %v1485, %v1554
        %v1556 = vpop.f32.mrf.mxu0
        %1557 = vdwg.mxu0
        %1558 = vmatprep.subr.mxu0 0.0
        %1559 = vmatpush1.msra.mxu0 %v1006
        %1560 = vmatprep.subr.mxu0 0.0
        %1561 = vmatpush1.msra.mxu0 %v1005
        %1562 = vmatprep.subr.mxu0 0.0
        %1563 = vmatpush1.msra.mxu0 %v1004
        %1564 = vmatprep.subr.mxu0 0.0
        %1565 = vmatpush1.msra.mxu0 %v1003
        %1566 = vmatprep.subr.mxu0 0.0
        %1567 = vmatpush1.msra.mxu0 %v1002
        %1568 = vmatprep.subr.mxu0 0.0
        %1569 = vmatpush1.msra.mxu0 %v1001
        %1570 = vmatprep.subr.mxu0 0.0
        %1571 = vmatpush1.msra.mxu0 %v1000
        %1572 = vmatprep.subr.mxu0 0.0
        %1573 = vmatpush1.msra.mxu0 %v999
        %1574 = vmatprep.subr.mxu0 0.0
        %1575 = vmatpush1.msra.mxu0 %v998
        %1576 = vmatprep.subr.mxu0 0.0
        %1577 = vmatpush1.msra.mxu0 %v997
        %1578 = vmatprep.subr.mxu0 0.0
        %1579 = vmatpush1.msra.mxu0 %v996
        %1580 = vmatprep.subr.mxu0 0.0
        %1581 = vmatpush1.msra.mxu0 %v995
        %1582 = vmatprep.subr.mxu0 0.0
        %1583 = vmatpush1.msra.mxu0 %v994
        %1584 = vmatprep.subr.mxu0 0.0
        %1585 = vmatpush1.msra.mxu0 %v993
        %1586 = vmatprep.subr.mxu0 0.0
        %1587 = vmatpush1.msra.mxu0 %v992
        %1588 = vmatprep.subr.mxu0 0.0
        %1589 = vmatpush1.msra.mxu0 %v991
        %1590 = vmatprep.subr.mxu0 0.0
        %1591 = vmatpush2.msra.mxu0 %v1022
        %1592 = vmatprep.subr.mxu0 0.0
        %1593 = vmatpush2.msra.mxu0 %v1021
        %1594 = vmatprep.subr.mxu0 0.0
        %1595 = vmatpush2.msra.mxu0 %v1020
        %1596 = vmatprep.subr.mxu0 0.0
        %1597 = vmatpush2.msra.mxu0 %v1019
        %1598 = vmatprep.subr.mxu0 0.0
        %1599 = vmatpush2.msra.mxu0 %v1018
        %1600 = vmatprep.subr.mxu0 0.0
        %1601 = vmatpush2.msra.mxu0 %v1017
        %1602 = vmatprep.subr.mxu0 0.0
        %1603 = vmatpush2.msra.mxu0 %v1016
        %1604 = vmatprep.subr.mxu0 0.0
        %1605 = vmatpush2.msra.mxu0 %v1015
        %1606 = vmatprep.subr.mxu0 0.0
        %1607 = vmatpush2.msra.mxu0 %v1014
        %1608 = vmatprep.subr.mxu0 0.0
        %1609 = vmatpush2.msra.mxu0 %v1013
        %1610 = vmatprep.subr.mxu0 0.0
        %1611 = vmatpush2.msra.mxu0 %v1012
        %1612 = vmatprep.subr.mxu0 0.0
        %1613 = vmatpush2.msra.mxu0 %v1011
        %1614 = vmatprep.subr.mxu0 0.0
        %1615 = vmatpush2.msra.mxu0 %v1010
        %1616 = vmatprep.subr.mxu0 0.0
        %1617 = vmatpush2.msra.mxu0 %v1009
        %1618 = vmatprep.subr.mxu0 0.0
        %1619 = vmatpush2.msra.mxu0 %v1008
        %1620 = vmatprep.subr.mxu0 0.0
        %1621 = vmatpush2.msra.mxu0 %v1007
        %1622 = vmatprep.mubr.f32.mxu0 %v1113
        %1623 = vmatmul.mubr.f32.gmra.mxu0 %v1109
        %v1624 = vpop.f32.mrf.mxu0
        %v1625 = vadd.f32 %v1555, %v1624
        %v1626 = vpop.f32.mrf.mxu0
        %1627 = vdwg.mxu0
        %1628 = vmatprep.subr.mxu0 0.0
        %1629 = vmatpush1.msra.mxu0 %v1038
        %1630 = vmatprep.subr.mxu0 0.0
        %1631 = vmatpush1.msra.mxu0 %v1037
        %1632 = vmatprep.subr.mxu0 0.0
        %1633 = vmatpush1.msra.mxu0 %v1036
        %1634 = vmatprep.subr.mxu0 0.0
        %1635 = vmatpush1.msra.mxu0 %v1035
        %1636 = vmatprep.subr.mxu0 0.0
        %1637 = vmatpush1.msra.mxu0 %v1034
        %1638 = vmatprep.subr.mxu0 0.0
        %1639 = vmatpush1.msra.mxu0 %v1033
        %1640 = vmatprep.subr.mxu0 0.0
        %1641 = vmatpush1.msra.mxu0 %v1032
        %1642 = vmatprep.subr.mxu0 0.0
        %1643 = vmatpush1.msra.mxu0 %v1031
        %1644 = vmatprep.subr.mxu0 0.0
        %1645 = vmatpush1.msra.mxu0 %v1030
        %1646 = vmatprep.subr.mxu0 0.0
        %1647 = vmatpush1.msra.mxu0 %v1029
        %1648 = vmatprep.subr.mxu0 0.0
        %1649 = vmatpush1.msra.mxu0 %v1028
        %1650 = vmatprep.subr.mxu0 0.0
        %1651 = vmatpush1.msra.mxu0 %v1027
        %1652 = vmatprep.subr.mxu0 0.0
        %1653 = vmatpush1.msra.mxu0 %v1026
        %1654 = vmatprep.subr.mxu0 0.0
        %1655 = vmatpush1.msra.mxu0 %v1025
        %1656 = vmatprep.subr.mxu0 0.0
        %1657 = vmatpush1.msra.mxu0 %v1024
        %1658 = vmatprep.subr.mxu0 0.0
        %1659 = vmatpush1.msra.mxu0 %v1023
        %1660 = vmatprep.subr.mxu0 0.0
        %1661 = vmatpush2.msra.mxu0 %v1054
        %1662 = vmatprep.subr.mxu0 0.0
        %1663 = vmatpush2.msra.mxu0 %v1053
        %1664 = vmatprep.subr.mxu0 0.0
        %1665 = vmatpush2.msra.mxu0 %v1052
        %1666 = vmatprep.subr.mxu0 0.0
        %1667 = vmatpush2.msra.mxu0 %v1051
        %1668 = vmatprep.subr.mxu0 0.0
        %1669 = vmatpush2.msra.mxu0 %v1050
        %1670 = vmatprep.subr.mxu0 0.0
        %1671 = vmatpush2.msra.mxu0 %v1049
        %1672 = vmatprep.subr.mxu0 0.0
        %1673 = vmatpush2.msra.mxu0 %v1048
        %1674 = vmatprep.subr.mxu0 0.0
        %1675 = vmatpush2.msra.mxu0 %v1047
        %1676 = vmatprep.subr.mxu0 0.0
        %1677 = vmatpush2.msra.mxu0 %v1046
        %1678 = vmatprep.subr.mxu0 0.0
        %1679 = vmatpush2.msra.mxu0 %v1045
        %1680 = vmatprep.subr.mxu0 0.0
        %1681 = vmatpush2.msra.mxu0 %v1044
        %1682 = vmatprep.subr.mxu0 0.0
        %1683 = vmatpush2.msra.mxu0 %v1043
        %1684 = vmatprep.subr.mxu0 0.0
        %1685 = vmatpush2.msra.mxu0 %v1042
        %1686 = vmatprep.subr.mxu0 0.0
        %1687 = vmatpush2.msra.mxu0 %v1041
        %1688 = vmatprep.subr.mxu0 0.0
        %1689 = vmatpush2.msra.mxu0 %v1040
        %1690 = vmatprep.subr.mxu0 0.0
        %1691 = vmatpush2.msra.mxu0 %v1039
        %1692 = vmatprep.mubr.f32.mxu0 %v1121
        %1693 = vmatmul.mubr.f32.gmra.mxu0 %v1117
        %v1694 = vpop.f32.mrf.mxu0
        %v1695 = vadd.f32 %v1625, %v1694
        %v1696 = vpop.f32.mrf.mxu0
        %1697 = vdwg.mxu0
        %vm1698 = vcmask 73728
        %1699 = vst.msk [vmem:[%s243] sm:$0x1] %vm1698, %v1695
        %s1700 = sand.u32 %s159, 1
        %s1701 = scalar_lea.sflag [#allocation5], %s1700
        %s1702 = sand.u32 %s159, 1
        %s1703 = scalar_lea.vmem [#allocation4], %s1702
        // Predicated region
        $region45: #{transform_net_forward.1} parent=43 // pred_check
          %p1704 = pneg %p169
        $region46: #{transform_net_forward.1} parent=43 // pred_check_branch
          %1706 = sbr.rel (%p1704) target = $region48
        $region47: #{transform_net_forward.1} parent=43 // pred_region
          %s1708 = ssub.s32 16, 16
          %1709 = vsyncadd %s1701, %s1708
          %s1710 = smul.addr %s20, 16
          %s1711 = scalar_lea.hbm %s6, %s1710
          %s1713 = sshll.u32 %s1703, 4
          %s1714 = int_to_ptr.vmem [resolvable:$true] %s1713
          %1716 = dma.vmem_to_hbm [thread:$0]  %s1714, 16, %s1711, %s1701
        $region48: #{transform_net_forward.1} parent=43 // pred_fallthru
          _
      $region44: #{transform_net_forward.1} parent=5 // pred_fallthru
        _
      %p1717 = scmp.le.s32.totalorder 2, %s15
      // Predicated region
      $region49: #{transform_net_forward.1} parent=5 // pred_check
        %p1718 = pneg %p1717
      $region50: #{transform_net_forward.1} parent=5 // pred_check_branch
        %1720 = sbr.rel (%p1718) target = $region52
      $region51: #{transform_net_forward.1} parent=5 // pred_region
        %s1721 = ssub.s32 %s15, 2
        // Predicated region
        $region53: #{transform_net_forward.1} parent=51 // pred_check
          %p1722 = pneg %p175
        $region54: #{transform_net_forward.1} parent=51 // pred_check_branch
          %1724 = sbr.rel (%p1722) target = $region56
        $region55: #{transform_net_forward.1} parent=51 // pred_region
          %s1725 = sand.u32 %s160, 1
          %s1726 = scalar_lea.sflag [#allocation5], %s1725
          %s1727 = sand.u32 %s160, 1
          %s1728 = scalar_lea.vmem [#allocation4], %s1727
          %1729 = dma.done %s1726, 16
        $region56: #{transform_net_forward.1} parent=51 // pred_fallthru
          _
      $region52: #{transform_net_forward.1} parent=5 // pred_fallthru
        _
    $region6: #{transform_net_forward.1} parent=1 // loop_footer
      %s19 = sadd.s32 1, %s15
    $region7: #{transform_net_forward.1} parent=1 // loop_footer_branch
      %14 = sbr.rel target = $region3
    $region8: #{transform_net_forward.1} parent=1 // loop_exit
      _
    %1730 = vsyncpa [#allocation5], 1
    %s1731 = scalar_lea.sflag [#allocation5], 1
    %1732 = vsyncpa %s1731, 1

</llo_original>
